<compile_context>
chip_gen: v6e
topology: v6e:2x2x1
jax: 0.10.0
libtpu: 0.0.40
codegen_flags: <defaults>
</compile_context>

<pallas_src>
import functools

import jax
import jax.numpy as jnp
from jax.experimental import pallas as pl
from jax.experimental.pallas import tpu as pltpu


def _multibox_kernel(nobj_ref,        # (B, 1) int32   true object count per image
                     pri_cxcy_ref,    # (4, Pp) f32    prior cx, cy, w, h (coord-major)
                     pri_xy_ref,      # (4, Pp) f32    prior xmin, ymin, xmax, ymax
                     gt_ref,          # (M, B, 8) f32  [xmin,ymin,xmax,ymax,label,0,0,0]
                     locs_ref,        # (4, B, Pp) f32 predicted locs, coord-major
                     scores_ref,      # (C, B, Pp) f32 predicted scores, class-major
                     out_ref,         # (1, B, 128) f32
                     *, threshold, neg_pos_ratio, p_real, n_search_iters):
    f32 = jnp.float32

    pri_cxcy = pri_cxcy_ref[...]
    pri_xy = pri_xy_ref[...]
    gt = gt_ref[...]
    locs = locs_ref[...]
    scores = scores_ref[...]
    n_obj = nobj_ref[...]                                     # (B, 1) int32

    M, B, _ = gt.shape
    C = scores.shape[0]
    Pp = pri_xy.shape[1]

    # ---------------- Jaccard overlap: objects x images x priors (M, B, Pp) ----------
    p_xmin = pri_xy[0:1, :]
    p_ymin = pri_xy[1:2, :]
    p_xmax = pri_xy[2:3, :]
    p_ymax = pri_xy[3:4, :]
    b_xmin = gt[:, :, 0:1]
    b_ymin = gt[:, :, 1:2]
    b_xmax = gt[:, :, 2:3]
    b_ymax = gt[:, :, 3:4]
    labels_f = gt[:, :, 4:5]

    iw = jnp.maximum(jnp.minimum(p_xmax, b_xmax) - jnp.maximum(p_xmin, b_xmin), 0.0)
    ih = jnp.maximum(jnp.minimum(p_ymax, b_ymax) - jnp.maximum(p_ymin, b_ymin), 0.0)
    inter = iw * ih                                            # (M, B, Pp)
    area_p = (p_xmax - p_xmin) * (p_ymax - p_ymin)             # (1, Pp) -> broadcast
    area_b = (b_xmax - b_xmin) * (b_ymax - b_ymin)             # (M, B, 1)
    overlap = inter / jnp.maximum(area_p + area_b - inter, 1e-10)

    obj_iota = jax.lax.broadcasted_iota(jnp.int32, (M, B, Pp), 0)
    prior_iota = jax.lax.broadcasted_iota(jnp.int32, (M, B, Pp), 2)
    valid_obj = obj_iota < n_obj                               # masks padded objects
    if p_real != Pp:
        valid = jnp.logical_and(valid_obj, prior_iota < p_real)
    else:
        valid = valid_obj
    overlap = jnp.where(valid, overlap, -1.0)

    # per-prior best object (reduce over the leading object axis, first index on tie)
    ovl_best3 = jnp.max(overlap, axis=0, keepdims=True)                        # (1,B,Pp)
    obj_best3 = jnp.min(jnp.where(overlap == ovl_best3, obj_iota, M),
                        axis=0, keepdims=True)                                 # (1,B,Pp)
    # per-object best prior (reduce over lanes, first index on tie)
    ovl_obj3 = jnp.max(overlap, axis=2, keepdims=True)                         # (M,B,1)
    prior_obj3 = jnp.min(jnp.where(overlap == ovl_obj3, prior_iota, Pp),
                         axis=2, keepdims=True)                                # (M,B,1)

    # force each valid object onto its best prior (later object wins on a clash)
    force = jnp.logical_and(prior_iota == prior_obj3, valid_obj)               # (M,B,Pp)
    forced3 = jnp.max(jnp.where(force, obj_iota, -1), axis=0, keepdims=True)   # (1,B,Pp)
    is_forced3 = forced3 >= 0
    obj_assign3 = jnp.where(is_forced3, forced3, obj_best3)                    # (1,B,Pp)

    # one-hot gather of assigned label / box (exactly one object matches per prior)
    sel = obj_iota == obj_assign3                                              # (M,B,Pp)

    def gather(col):                                           # (M,B,1) -> (B,Pp)
        return jnp.sum(jnp.where(sel, col, 0.0), axis=0)

    label_g = gather(labels_f)
    a_xmin = gather(b_xmin)
    a_ymin = gather(b_ymin)
    a_xmax = gather(b_xmax)
    a_ymax = gather(b_ymax)

    is_forced = jnp.max(jnp.where(force, 1.0, 0.0), axis=0) > 0.5              # (B,Pp)
    ovl_prior = jnp.max(overlap, axis=0)                                       # (B,Pp)
    keep = jnp.logical_or(is_forced, ovl_prior >= threshold)
    label_prior = jnp.where(keep, label_g, 0.0)                                # (B,Pp)
    positive = label_prior != 0.0
    n_pos = jnp.sum(positive.astype(f32), axis=1, keepdims=True)               # (B,1)

    # ---------------- localization target (gcxgcy encoding) -> L1 partial sum --------
    pr_cx = pri_cxcy[0:1, :]
    pr_cy = pri_cxcy[1:2, :]
    pr_w = jnp.maximum(pri_cxcy[2:3, :], 1e-10)   # padded prior lanes only
    pr_h = jnp.maximum(pri_cxcy[3:4, :], 1e-10)
    a_cx = (a_xmin + a_xmax) * 0.5
    a_cy = (a_ymin + a_ymax) * 0.5
    a_w = jnp.maximum(a_xmax - a_xmin, 1e-10)     # clamp only affects non-positive priors
    a_h = jnp.maximum(a_ymax - a_ymin, 1e-10)
    g_cx = (a_cx - pr_cx) * 10.0 / pr_w
    g_cy = (a_cy - pr_cy) * 10.0 / pr_h
    g_w = jnp.log(a_w / pr_w) * 5.0
    g_h = jnp.log(a_h / pr_h) * 5.0
    l1 = (jnp.abs(locs[0] - g_cx) + jnp.abs(locs[1] - g_cy) +
          jnp.abs(locs[2] - g_w) + jnp.abs(locs[3] - g_h))                     # (B,Pp)
    loc_abs = jnp.sum(jnp.where(positive, l1, 0.0), axis=1, keepdims=True)     # (B,1)

    # ---------------- per-prior cross entropy (class axis leading) -------------------
    s_max = jnp.max(scores, axis=0)                                            # (B,Pp)
    sum_exp = jnp.sum(jnp.exp(scores - s_max), axis=0)                         # (B,Pp)
    lse = jnp.log(sum_exp) + s_max
    cls_iota = jax.lax.broadcasted_iota(jnp.int32, (C, B, Pp), 0).astype(f32)
    s_true = jnp.sum(jnp.where(cls_iota == label_prior, scores, 0.0), axis=0)
    ce = lse - s_true                                                          # (B,Pp)
    conf_pos = jnp.sum(jnp.where(positive, ce, 0.0), axis=1, keepdims=True)    # (B,1)

    # ---------------- hard-negative mining: top-k sum via value-threshold search -----
    if p_real != Pp:
        lane2 = jax.lax.broadcasted_iota(jnp.int32, (B, Pp), 1)
        neg_ok = jnp.logical_and(jnp.logical_not(positive), lane2 < p_real)
    else:
        neg_ok = jnp.logical_not(positive)
    conf_neg = jnp.where(neg_ok, ce, 0.0)                      # (B,Pp), all values >= 0

    # k = neg_pos_ratio * n_pos (exact integer in f32), clamped like the reference sort
    k = jnp.minimum(jnp.float32(neg_pos_ratio) * n_pos, jnp.float32(Pp))       # (B,1)
    lo0 = jnp.full((B, 1), -1.0, f32)           # count(v > lo0) = Pp >= k
    hi0 = jnp.max(conf_neg, axis=1, keepdims=True)             # count(v > hi0) = 0 < k

    def search_step(_, carry):
        lo, hi = carry
        mid = 0.5 * (lo + hi)
        cnt = jnp.sum((conf_neg > mid).astype(f32), axis=1, keepdims=True)
        go_lo = cnt >= k
        return jnp.where(go_lo, mid, lo), jnp.where(go_lo, hi, mid)

    lo, hi = jax.lax.fori_loop(0, n_search_iters, search_step, (lo0, hi0),
                               unroll=True)

    # k-th largest value (an actual data value), strictly-greater sum, tie correction
    kth = jnp.max(jnp.where(conf_neg <= hi, conf_neg, -1.0), axis=1, keepdims=True)
    gt_mask = conf_neg > kth
    c_gt = jnp.sum(gt_mask.astype(f32), axis=1, keepdims=True)
    s_gt = jnp.sum(jnp.where(gt_mask, conf_neg, 0.0), axis=1, keepdims=True)
    conf_hneg = s_gt + jnp.maximum(k - c_gt, 0.0) * kth
    conf_hneg = jnp.where(k >= 0.5, conf_hneg, 0.0)            # k == 0 -> zero negatives

    # ---------------- pack per-image partial sums into one dense (B, 128) tile -------
    lane = jax.lax.broadcasted_iota(jnp.int32, (B, 128), 1)
    tile = jnp.where(lane == 0, loc_abs, 0.0)
    tile = jnp.where(lane == 1, n_pos, tile)
    tile = jnp.where(lane == 2, conf_pos, tile)
    tile = jnp.where(lane == 3, conf_hneg, tile)
    out_ref[0] = tile                                          # single full-tile store


def multibox_loss(pred_locs, pred_scores, boxes_xy, labels, n_objects,
                  priors_cxcy, priors_xy, threshold=0.5, neg_pos_ratio=3,
                  alpha=1.0, images_per_step=8):
    f32 = jnp.float32
    N, P, _ = pred_locs.shape
    C = pred_scores.shape[2]
    M = boxes_xy.shape[1]

    B = int(images_per_step)
    n_blk = pl.cdiv(N, B)
    N_pad = n_blk * B                       # padded images get n_obj = 0 -> contribute 0
    M_pad = pl.cdiv(M, 8) * 8               # sublane-aligned objects
    P_pad = pl.cdiv(P, 128) * 128           # lane-aligned priors

    # priors, coordinate-major (4, P_pad)
    pri_cxcy = jnp.transpose(priors_cxcy.astype(f32))
    pri_xy = jnp.transpose(priors_xy.astype(f32))
    if P_pad != P:
        pri_cxcy = jnp.pad(pri_cxcy, ((0, 0), (0, P_pad - P)))
        pri_xy = jnp.pad(pri_xy, ((0, 0), (0, P_pad - P)))

    # predicted locs coord-major (4, N_pad, P_pad); scores class-major (C, N_pad, P_pad)
    locs = jnp.pad(jnp.transpose(pred_locs.astype(f32), (2, 0, 1)),
                   ((0, 0), (0, N_pad - N), (0, P_pad - P)))
    scores = jnp.pad(jnp.transpose(pred_scores.astype(f32), (2, 0, 1)),
                     ((0, 0), (0, N_pad - N), (0, P_pad - P)))

    # ground truth, object-major (M_pad, N_pad, 8): [xmin,ymin,xmax,ymax,label,0,0,0]
    gt = jnp.concatenate([jnp.transpose(boxes_xy.astype(f32), (1, 0, 2)),
                          jnp.transpose(labels.astype(f32))[:, :, None]], axis=-1)
    gt = jnp.pad(gt, ((0, M_pad - M), (0, N_pad - N), (0, 3)))

    nobj = jnp.pad(n_objects.astype(jnp.int32), (0, N_pad - N))[:, None]       # (N_pad,1)

    kernel = functools.partial(
        _multibox_kernel, threshold=float(threshold),
        neg_pos_ratio=float(neg_pos_ratio), p_real=int(P), n_search_iters=40)

    grid_spec = pltpu.PrefetchScalarGridSpec(
        num_scalar_prefetch=0,
        grid=(n_blk,),
        in_specs=[
            pl.BlockSpec((B, 1), lambda i: (i, 0)),              # n_objects
            pl.BlockSpec((4, P_pad), lambda i: (0, 0)),          # priors (cx,cy,w,h)
            pl.BlockSpec((4, P_pad), lambda i: (0, 0)),          # priors (xmin..ymax)
            pl.BlockSpec((M_pad, B, 8), lambda i: (0, i, 0)),    # gt boxes + labels
            pl.BlockSpec((4, B, P_pad), lambda i: (0, i, 0)),    # predicted locs
            pl.BlockSpec((C, B, P_pad), lambda i: (0, i, 0)),    # predicted scores
        ],
        out_specs=pl.BlockSpec((1, B, 128), lambda i: (i, 0, 0)),
    )

    cost = pl.CostEstimate(
        flops=int(N_pad * (40 * M_pad * P_pad + 10 * C * P_pad + 220 * P_pad)),
        transcendentals=int(N_pad * (C * P_pad + 4 * P_pad)),
        bytes_accessed=int(4 * (N_pad * (C * P_pad + 4 * P_pad + 8 * M_pad + 129)
                                + 8 * P_pad)),
    )

    partials = pl.pallas_call(
        kernel,
        grid_spec=grid_spec,
        out_shape=jax.ShapeDtypeStruct((n_blk, B, 128), f32),
        compiler_params=pltpu.CompilerParams(
            dimension_semantics=("parallel",),
            vmem_limit_bytes=48 * 1024 * 1024),   # fits v7x's 64 MiB physical VMEM
        cost_estimate=cost,
    )(nobj, pri_cxcy, pri_xy, gt, locs, scores)

    # per-image partial sums; padded images are exact zeros
    p = partials.reshape(N_pad, 128)[:, :4]
    loc_sums, n_pos, pos_sums, hneg_sums = p[:, 0], p[:, 1], p[:, 2], p[:, 3]
    total_pos = jnp.sum(n_pos)
    # matches the reference: NaN if there are zero positives in the whole batch
    loc_loss = jnp.sum(loc_sums) / (4.0 * total_pos)   # nn.L1Loss() mean over (n_pos, 4)
    conf_loss = (jnp.sum(hneg_sums) + jnp.sum(pos_sums)) / total_pos
    return conf_loss + alpha * loc_loss


def cxcy_to_xy(cxcy):
    return jnp.concatenate([cxcy[:, :2] - cxcy[:, 2:] / 2.0,
                            cxcy[:, :2] + cxcy[:, 2:] / 2.0], axis=1)


if __name__ == "__main__":
    N, M, C, P = 2, 8, 8, 128

    # Deterministic module "parameter": 8x8 feature-map grid, 2 square scales -> 128 priors.
    fm = 8
    pri = []
    for r in range(fm):
        for c in range(fm):
            cx = (c + 0.5) / fm
            cy = (r + 0.5) / fm
            for s in (0.2, 0.4):
                pri.append([cx, cy, s, s])
    priors_cxcy = jnp.clip(jnp.array(pri, dtype=jnp.float32), 0.0, 1.0)   # (128, 4)
    priors_xy = cxcy_to_xy(priors_cxcy)

    key = jax.random.PRNGKey(0)
    k1, k2, k3, k4, k5 = jax.random.split(key, 5)
    pred_locs = jax.random.normal(k1, (N, P, 4), jnp.float32)
    pred_scores = jax.random.normal(k2, (N, P, C), jnp.float32)
    centers = jax.random.uniform(k3, (N, M, 2), minval=0.25, maxval=0.75)
    sizes = jax.random.uniform(k4, (N, M, 2), minval=0.1, maxval=0.4)
    boxes_xy = jnp.concatenate([centers - sizes / 2.0, centers + sizes / 2.0], axis=-1)
    labels = jax.random.randint(k5, (N, M), 1, C)          # classes 1..C-1 (0 = background)
    # TODO(synk): the PyTorch module takes a Python list of per-image tensors; here the
    # variable-length lists are padded to M and the true counts are passed as n_objects.
    n_objects = jnp.array([M, M - 3], dtype=jnp.int32)

    loss = multibox_loss(pred_locs, pred_scores, boxes_xy, labels, n_objects,
                         priors_cxcy, priors_xy,
                         threshold=0.5, neg_pos_ratio=3, alpha=1.0)
    loss = jax.block_until_ready(loss)
    assert bool(jnp.isfinite(loss))
    print("KERNEL_OK")
</pallas_src>

<mosaic_0001>
module attributes {stable_mosaic.version = 11 : i64} {
  func.func @_multibox_kernel(%arg0: i32, %arg1: memref<8x1xi32, #tpu.memory_space<vmem>>, %arg2: memref<4x128xf32, #tpu.memory_space<vmem>>, %arg3: memref<4x128xf32, #tpu.memory_space<vmem>>, %arg4: memref<8x8x8xf32, #tpu.memory_space<vmem>>, %arg5: memref<4x8x128xf32, #tpu.memory_space<vmem>>, %arg6: memref<8x8x128xf32, #tpu.memory_space<vmem>>, %arg7: memref<1x8x128xf32, #tpu.memory_space<vmem>>) attributes {dimension_semantics = [#tpu.dimension_semantics<parallel>], iteration_bounds = array<i64: 1>, scalar_prefetch = 0 : i64, scratch_operands = 0 : i64, tpu.core_type = #tpu.core_type<tc>, window_params = [{transform_indices = @transform_0, window_bounds = array<i64: 8, 1>}, {pipeline_mode = #tpu.pipeline_mode<synchronous>, transform_indices = @transform_1, window_bounds = array<i64: 4, 128>}, {pipeline_mode = #tpu.pipeline_mode<synchronous>, transform_indices = @transform_2, window_bounds = array<i64: 4, 128>}, {transform_indices = @transform_3, window_bounds = array<i64: 8, 8, 8>}, {transform_indices = @transform_4, window_bounds = array<i64: 4, 8, 128>}, {transform_indices = @transform_5, window_bounds = array<i64: 8, 8, 128>}, {transform_indices = @transform_6, window_bounds = array<i64: 1, 8, 128>}]} {
    %c0 = arith.constant 0 : index
    %c0_0 = arith.constant 0 : index
    %0 = vector.load %arg2[%c0, %c0_0] : memref<4x128xf32, #tpu.memory_space<vmem>>, vector<4x128xf32>
    %c0_1 = arith.constant 0 : index
    %c0_2 = arith.constant 0 : index
    %1 = vector.load %arg3[%c0_1, %c0_2] : memref<4x128xf32, #tpu.memory_space<vmem>>, vector<4x128xf32>
    %c0_3 = arith.constant 0 : index
    %c0_4 = arith.constant 0 : index
    %c0_5 = arith.constant 0 : index
    %2 = vector.load %arg4[%c0_3, %c0_4, %c0_5] : memref<8x8x8xf32, #tpu.memory_space<vmem>>, vector<8x8x8xf32>
    %c0_6 = arith.constant 0 : index
    %c0_7 = arith.constant 0 : index
    %c0_8 = arith.constant 0 : index
    %3 = vector.load %arg5[%c0_6, %c0_7, %c0_8] : memref<4x8x128xf32, #tpu.memory_space<vmem>>, vector<4x8x128xf32>
    %c0_9 = arith.constant 0 : index
    %c0_10 = arith.constant 0 : index
    %c0_11 = arith.constant 0 : index
    %4 = vector.load %arg6[%c0_9, %c0_10, %c0_11] : memref<8x8x128xf32, #tpu.memory_space<vmem>>, vector<8x8x128xf32>
    %c0_12 = arith.constant 0 : index
    %c0_13 = arith.constant 0 : index
    %5 = vector.load %arg1[%c0_12, %c0_13] : memref<8x1xi32, #tpu.memory_space<vmem>>, vector<8x1xi32>
    %6 = vector.extract_strided_slice %1 {offsets = [0, 0], sizes = [1, 128], strides = [1, 1]} : vector<4x128xf32> to vector<1x128xf32>
    %7 = vector.extract_strided_slice %1 {offsets = [1, 0], sizes = [1, 128], strides = [1, 1]} : vector<4x128xf32> to vector<1x128xf32>
    %8 = vector.extract_strided_slice %1 {offsets = [2, 0], sizes = [1, 128], strides = [1, 1]} : vector<4x128xf32> to vector<1x128xf32>
    %9 = vector.extract_strided_slice %1 {offsets = [3, 0], sizes = [1, 128], strides = [1, 1]} : vector<4x128xf32> to vector<1x128xf32>
    %10 = vector.extract_strided_slice %2 {offsets = [0, 0, 0], sizes = [8, 8, 1], strides = [1, 1, 1]} : vector<8x8x8xf32> to vector<8x8x1xf32>
    %11 = vector.extract_strided_slice %2 {offsets = [0, 0, 1], sizes = [8, 8, 1], strides = [1, 1, 1]} : vector<8x8x8xf32> to vector<8x8x1xf32>
    %12 = vector.extract_strided_slice %2 {offsets = [0, 0, 2], sizes = [8, 8, 1], strides = [1, 1, 1]} : vector<8x8x8xf32> to vector<8x8x1xf32>
    %13 = vector.extract_strided_slice %2 {offsets = [0, 0, 3], sizes = [8, 8, 1], strides = [1, 1, 1]} : vector<8x8x8xf32> to vector<8x8x1xf32>
    %14 = vector.extract_strided_slice %2 {offsets = [0, 0, 4], sizes = [8, 8, 1], strides = [1, 1, 1]} : vector<8x8x8xf32> to vector<8x8x1xf32>
    %15 = vector.shape_cast %8 : vector<1x128xf32> to vector<1x1x128xf32>
    %16 = vector.broadcast %15 : vector<1x1x128xf32> to vector<8x8x128xf32>
    %17 = vector.broadcast %12 : vector<8x8x1xf32> to vector<8x8x128xf32>
    %18 = arith.minimumf %16, %17 : vector<8x8x128xf32>
    %19 = vector.shape_cast %6 : vector<1x128xf32> to vector<1x1x128xf32>
    %20 = vector.broadcast %19 : vector<1x1x128xf32> to vector<8x8x128xf32>
    %21 = vector.broadcast %10 : vector<8x8x1xf32> to vector<8x8x128xf32>
    %22 = arith.maximumf %20, %21 : vector<8x8x128xf32>
    %23 = arith.subf %18, %22 : vector<8x8x128xf32>
    %cst = arith.constant 0.000000e+00 : f32
    %24 = vector.broadcast %cst : f32 to vector<8x8x128xf32>
    %25 = arith.maximumf %23, %24 : vector<8x8x128xf32>
    %26 = vector.shape_cast %9 : vector<1x128xf32> to vector<1x1x128xf32>
    %27 = vector.broadcast %26 : vector<1x1x128xf32> to vector<8x8x128xf32>
    %28 = vector.broadcast %13 : vector<8x8x1xf32> to vector<8x8x128xf32>
    %29 = arith.minimumf %27, %28 : vector<8x8x128xf32>
    %30 = vector.shape_cast %7 : vector<1x128xf32> to vector<1x1x128xf32>
    %31 = vector.broadcast %30 : vector<1x1x128xf32> to vector<8x8x128xf32>
    %32 = vector.broadcast %11 : vector<8x8x1xf32> to vector<8x8x128xf32>
    %33 = arith.maximumf %31, %32 : vector<8x8x128xf32>
    %34 = arith.subf %29, %33 : vector<8x8x128xf32>
    %cst_14 = arith.constant 0.000000e+00 : f32
    %35 = vector.broadcast %cst_14 : f32 to vector<8x8x128xf32>
    %36 = arith.maximumf %34, %35 : vector<8x8x128xf32>
    %37 = arith.mulf %25, %36 : vector<8x8x128xf32>
    %38 = arith.subf %8, %6 : vector<1x128xf32>
    %39 = arith.subf %9, %7 : vector<1x128xf32>
    %40 = arith.mulf %38, %39 : vector<1x128xf32>
    %41 = arith.subf %12, %10 : vector<8x8x1xf32>
    %42 = arith.subf %13, %11 : vector<8x8x1xf32>
    %43 = arith.mulf %41, %42 : vector<8x8x1xf32>
    %44 = vector.shape_cast %40 : vector<1x128xf32> to vector<1x1x128xf32>
    %45 = vector.broadcast %44 : vector<1x1x128xf32> to vector<8x8x128xf32>
    %46 = vector.broadcast %43 : vector<8x8x1xf32> to vector<8x8x128xf32>
    %47 = arith.addf %45, %46 : vector<8x8x128xf32>
    %48 = arith.subf %47, %37 : vector<8x8x128xf32>
    %cst_15 = arith.constant 1.000000e-10 : f32
    %49 = vector.broadcast %cst_15 : f32 to vector<8x8x128xf32>
    %50 = arith.maximumf %48, %49 : vector<8x8x128xf32>
    %51 = arith.divf %37, %50 : vector<8x8x128xf32>
    %52 = tpu.iota {dimensions = array<i32: 0>} : vector<8x8x128xi32>
    %53 = tpu.iota {dimensions = array<i32: 2>} : vector<8x8x128xi32>
    %54 = vector.shape_cast %5 : vector<8x1xi32> to vector<1x8x1xi32>
    %55 = vector.broadcast %54 : vector<1x8x1xi32> to vector<8x8x128xi32>
    %56 = arith.cmpi slt, %52, %55 : vector<8x8x128xi32>
    %cst_16 = arith.constant -1.000000e+00 : f32
    %57 = vector.broadcast %cst_16 : f32 to vector<8x8x128xf32>
    %58 = arith.select %56, %51, %57 : vector<8x8x128xi1>, vector<8x8x128xf32>
    %cst_17 = arith.constant dense<0xFF800000> : vector<8x128xf32>
    %59 = vector.multi_reduction <maximumf>, %58, %cst_17 [0] : vector<8x8x128xf32> to vector<8x128xf32>
    %60 = vector.shape_cast %59 : vector<8x128xf32> to vector<1x8x128xf32>
    %61 = vector.broadcast %60 : vector<1x8x128xf32> to vector<8x8x128xf32>
    %62 = arith.cmpf oeq, %58, %61 : vector<8x8x128xf32>
    %c8_i32 = arith.constant 8 : i32
    %63 = vector.broadcast %c8_i32 : i32 to vector<8x8x128xi32>
    %64 = arith.select %62, %52, %63 : vector<8x8x128xi1>, vector<8x8x128xi32>
    %cst_18 = arith.constant dense<2147483647> : vector<8x128xi32>
    %65 = vector.multi_reduction <minsi>, %64, %cst_18 [0] : vector<8x8x128xi32> to vector<8x128xi32>
    %66 = vector.shape_cast %65 : vector<8x128xi32> to vector<1x8x128xi32>
    %cst_19 = arith.constant dense<0xFF800000> : vector<8x8xf32>
    %67 = vector.multi_reduction <maximumf>, %58, %cst_19 [2] : vector<8x8x128xf32> to vector<8x8xf32>
    %68 = vector.shape_cast %67 : vector<8x8xf32> to vector<8x8x1xf32>
    %69 = vector.broadcast %68 : vector<8x8x1xf32> to vector<8x8x128xf32>
    %70 = arith.cmpf oeq, %58, %69 : vector<8x8x128xf32>
    %c128_i32 = arith.constant 128 : i32
    %71 = vector.broadcast %c128_i32 : i32 to vector<8x8x128xi32>
    %72 = arith.select %70, %53, %71 : vector<8x8x128xi1>, vector<8x8x128xi32>
    %cst_20 = arith.constant dense<2147483647> : vector<8x8xi32>
    %73 = vector.multi_reduction <minsi>, %72, %cst_20 [2] : vector<8x8x128xi32> to vector<8x8xi32>
    %74 = vector.shape_cast %73 : vector<8x8xi32> to vector<8x8x1xi32>
    %75 = vector.broadcast %74 : vector<8x8x1xi32> to vector<8x8x128xi32>
    %76 = arith.cmpi eq, %53, %75 : vector<8x8x128xi32>
    %77 = arith.andi %76, %56 : vector<8x8x128xi1>
    %c-1_i32 = arith.constant -1 : i32
    %78 = vector.broadcast %c-1_i32 : i32 to vector<8x8x128xi32>
    %79 = arith.select %77, %52, %78 : vector<8x8x128xi1>, vector<8x8x128xi32>
    %cst_21 = arith.constant dense<-2147483648> : vector<8x128xi32>
    %80 = vector.multi_reduction <maxsi>, %79, %cst_21 [0] : vector<8x8x128xi32> to vector<8x128xi32>
    %81 = vector.shape_cast %80 : vector<8x128xi32> to vector<1x8x128xi32>
    %c0_i32 = arith.constant 0 : i32
    %82 = vector.broadcast %c0_i32 : i32 to vector<1x8x128xi32>
    %83 = arith.cmpi sge, %81, %82 : vector<1x8x128xi32>
    %84 = arith.select %83, %81, %66 : vector<1x8x128xi1>, vector<1x8x128xi32>
    %85 = vector.broadcast %84 : vector<1x8x128xi32> to vector<8x8x128xi32>
    %86 = arith.cmpi eq, %52, %85 : vector<8x8x128xi32>
    %cst_22 = arith.constant 0.000000e+00 : f32
    %87 = vector.shape_cast %14 : vector<8x8x1xf32> to vector<8x8x1xf32>
    %88 = vector.broadcast %87 : vector<8x8x1xf32> to vector<8x8x128xf32>
    %89 = vector.broadcast %cst_22 : f32 to vector<8x8x128xf32>
    %90 = arith.select %86, %88, %89 : vector<8x8x128xi1>, vector<8x8x128xf32>
    %cst_23 = arith.constant dense<0.000000e+00> : vector<8x128xf32>
    %91 = vector.multi_reduction <add>, %90, %cst_23 [0] : vector<8x8x128xf32> to vector<8x128xf32>
    %cst_24 = arith.constant 0.000000e+00 : f32
    %92 = vector.shape_cast %10 : vector<8x8x1xf32> to vector<8x8x1xf32>
    %93 = vector.broadcast %92 : vector<8x8x1xf32> to vector<8x8x128xf32>
    %94 = vector.broadcast %cst_24 : f32 to vector<8x8x128xf32>
    %95 = arith.select %86, %93, %94 : vector<8x8x128xi1>, vector<8x8x128xf32>
    %cst_25 = arith.constant dense<0.000000e+00> : vector<8x128xf32>
    %96 = vector.multi_reduction <add>, %95, %cst_25 [0] : vector<8x8x128xf32> to vector<8x128xf32>
    %cst_26 = arith.constant 0.000000e+00 : f32
    %97 = vector.shape_cast %11 : vector<8x8x1xf32> to vector<8x8x1xf32>
    %98 = vector.broadcast %97 : vector<8x8x1xf32> to vector<8x8x128xf32>
    %99 = vector.broadcast %cst_26 : f32 to vector<8x8x128xf32>
    %100 = arith.select %86, %98, %99 : vector<8x8x128xi1>, vector<8x8x128xf32>
    %cst_27 = arith.constant dense<0.000000e+00> : vector<8x128xf32>
    %101 = vector.multi_reduction <add>, %100, %cst_27 [0] : vector<8x8x128xf32> to vector<8x128xf32>
    %cst_28 = arith.constant 0.000000e+00 : f32
    %102 = vector.shape_cast %12 : vector<8x8x1xf32> to vector<8x8x1xf32>
    %103 = vector.broadcast %102 : vector<8x8x1xf32> to vector<8x8x128xf32>
    %104 = vector.broadcast %cst_28 : f32 to vector<8x8x128xf32>
    %105 = arith.select %86, %103, %104 : vector<8x8x128xi1>, vector<8x8x128xf32>
    %cst_29 = arith.constant dense<0.000000e+00> : vector<8x128xf32>
    %106 = vector.multi_reduction <add>, %105, %cst_29 [0] : vector<8x8x128xf32> to vector<8x128xf32>
    %cst_30 = arith.constant 0.000000e+00 : f32
    %107 = vector.shape_cast %13 : vector<8x8x1xf32> to vector<8x8x1xf32>
    %108 = vector.broadcast %107 : vector<8x8x1xf32> to vector<8x8x128xf32>
    %109 = vector.broadcast %cst_30 : f32 to vector<8x8x128xf32>
    %110 = arith.select %86, %108, %109 : vector<8x8x128xi1>, vector<8x8x128xf32>
    %cst_31 = arith.constant dense<0.000000e+00> : vector<8x128xf32>
    %111 = vector.multi_reduction <add>, %110, %cst_31 [0] : vector<8x8x128xf32> to vector<8x128xf32>
    %cst_32 = arith.constant 1.000000e+00 : f32
    %cst_33 = arith.constant 0.000000e+00 : f32
    %112 = vector.broadcast %cst_32 : f32 to vector<8x8x128xf32>
    %113 = vector.broadcast %cst_33 : f32 to vector<8x8x128xf32>
    %114 = arith.select %77, %112, %113 : vector<8x8x128xi1>, vector<8x8x128xf32>
    %cst_34 = arith.constant dense<0xFF800000> : vector<8x128xf32>
    %115 = vector.multi_reduction <maximumf>, %114, %cst_34 [0] : vector<8x8x128xf32> to vector<8x128xf32>
    %cst_35 = arith.constant 5.000000e-01 : f32
    %116 = vector.broadcast %cst_35 : f32 to vector<8x128xf32>
    %117 = arith.cmpf ogt, %115, %116 : vector<8x128xf32>
    %cst_36 = arith.constant dense<0xFF800000> : vector<8x128xf32>
    %118 = vector.multi_reduction <maximumf>, %58, %cst_36 [0] : vector<8x8x128xf32> to vector<8x128xf32>
    %cst_37 = arith.constant 5.000000e-01 : f32
    %119 = vector.broadcast %cst_37 : f32 to vector<8x128xf32>
    %120 = arith.cmpf oge, %118, %119 : vector<8x128xf32>
    %121 = arith.ori %117, %120 : vector<8x128xi1>
    %cst_38 = arith.constant 0.000000e+00 : f32
    %122 = vector.broadcast %cst_38 : f32 to vector<8x128xf32>
    %123 = arith.select %121, %91, %122 : vector<8x128xi1>, vector<8x128xf32>
    %cst_39 = arith.constant 0.000000e+00 : f32
    %124 = vector.broadcast %cst_39 : f32 to vector<8x128xf32>
    %125 = arith.cmpf one, %123, %124 : vector<8x128xf32>
    %126 = arith.extui %125 : vector<8x128xi1> to vector<8x128xi32>
    %127 = arith.sitofp %126 : vector<8x128xi32> to vector<8x128xf32>
    %cst_40 = arith.constant dense<0.000000e+00> : vector<8xf32>
    %128 = vector.multi_reduction <add>, %127, %cst_40 [1] : vector<8x128xf32> to vector<8xf32>
    %129 = vector.shape_cast %128 : vector<8xf32> to vector<8x1xf32>
    %130 = vector.extract_strided_slice %0 {offsets = [0, 0], sizes = [1, 128], strides = [1, 1]} : vector<4x128xf32> to vector<1x128xf32>
    %131 = vector.extract_strided_slice %0 {offsets = [1, 0], sizes = [1, 128], strides = [1, 1]} : vector<4x128xf32> to vector<1x128xf32>
    %132 = vector.extract_strided_slice %0 {offsets = [2, 0], sizes = [1, 128], strides = [1, 1]} : vector<4x128xf32> to vector<1x128xf32>
    %cst_41 = arith.constant 1.000000e-10 : f32
    %133 = vector.broadcast %cst_41 : f32 to vector<1x128xf32>
    %134 = arith.maximumf %132, %133 : vector<1x128xf32>
    %135 = vector.extract_strided_slice %0 {offsets = [3, 0], sizes = [1, 128], strides = [1, 1]} : vector<4x128xf32> to vector<1x128xf32>
    %cst_42 = arith.constant 1.000000e-10 : f32
    %136 = vector.broadcast %cst_42 : f32 to vector<1x128xf32>
    %137 = arith.maximumf %135, %136 : vector<1x128xf32>
    %138 = arith.addf %96, %106 : vector<8x128xf32>
    %cst_43 = arith.constant 5.000000e-01 : f32
    %139 = vector.broadcast %cst_43 : f32 to vector<8x128xf32>
    %140 = arith.mulf %138, %139 : vector<8x128xf32>
    %141 = arith.addf %101, %111 : vector<8x128xf32>
    %cst_44 = arith.constant 5.000000e-01 : f32
    %142 = vector.broadcast %cst_44 : f32 to vector<8x128xf32>
    %143 = arith.mulf %141, %142 : vector<8x128xf32>
    %144 = arith.subf %106, %96 : vector<8x128xf32>
    %cst_45 = arith.constant 1.000000e-10 : f32
    %145 = vector.broadcast %cst_45 : f32 to vector<8x128xf32>
    %146 = arith.maximumf %144, %145 : vector<8x128xf32>
    %147 = arith.subf %111, %101 : vector<8x128xf32>
    %cst_46 = arith.constant 1.000000e-10 : f32
    %148 = vector.broadcast %cst_46 : f32 to vector<8x128xf32>
    %149 = arith.maximumf %147, %148 : vector<8x128xf32>
    %150 = vector.broadcast %130 : vector<1x128xf32> to vector<8x128xf32>
    %151 = arith.subf %140, %150 : vector<8x128xf32>
    %cst_47 = arith.constant 1.000000e+01 : f32
    %152 = vector.broadcast %cst_47 : f32 to vector<8x128xf32>
    %153 = arith.mulf %151, %152 : vector<8x128xf32>
    %154 = vector.broadcast %134 : vector<1x128xf32> to vector<8x128xf32>
    %155 = arith.divf %153, %154 : vector<8x128xf32>
    %156 = vector.broadcast %131 : vector<1x128xf32> to vector<8x128xf32>
    %157 = arith.subf %143, %156 : vector<8x128xf32>
    %cst_48 = arith.constant 1.000000e+01 : f32
    %158 = vector.broadcast %cst_48 : f32 to vector<8x128xf32>
    %159 = arith.mulf %157, %158 : vector<8x128xf32>
    %160 = vector.broadcast %137 : vector<1x128xf32> to vector<8x128xf32>
    %161 = arith.divf %159, %160 : vector<8x128xf32>
    %162 = vector.broadcast %134 : vector<1x128xf32> to vector<8x128xf32>
    %163 = arith.divf %146, %162 : vector<8x128xf32>
    %164 = math.log %163 : vector<8x128xf32>
    %cst_49 = arith.constant 5.000000e+00 : f32
    %165 = vector.broadcast %cst_49 : f32 to vector<8x128xf32>
    %166 = arith.mulf %164, %165 : vector<8x128xf32>
    %167 = vector.broadcast %137 : vector<1x128xf32> to vector<8x128xf32>
    %168 = arith.divf %149, %167 : vector<8x128xf32>
    %169 = math.log %168 : vector<8x128xf32>
    %cst_50 = arith.constant 5.000000e+00 : f32
    %170 = vector.broadcast %cst_50 : f32 to vector<8x128xf32>
    %171 = arith.mulf %169, %170 : vector<8x128xf32>
    %172 = vector.extract_strided_slice %3 {offsets = [0, 0, 0], sizes = [1, 8, 128], strides = [1, 1, 1]} : vector<4x8x128xf32> to vector<1x8x128xf32>
    %173 = vector.shape_cast %172 : vector<1x8x128xf32> to vector<8x128xf32>
    %174 = arith.subf %173, %155 : vector<8x128xf32>
    %175 = math.absf %174 : vector<8x128xf32>
    %176 = vector.extract_strided_slice %3 {offsets = [1, 0, 0], sizes = [1, 8, 128], strides = [1, 1, 1]} : vector<4x8x128xf32> to vector<1x8x128xf32>
    %177 = vector.shape_cast %176 : vector<1x8x128xf32> to vector<8x128xf32>
    %178 = arith.subf %177, %161 : vector<8x128xf32>
    %179 = math.absf %178 : vector<8x128xf32>
    %180 = arith.addf %175, %179 : vector<8x128xf32>
    %181 = vector.extract_strided_slice %3 {offsets = [2, 0, 0], sizes = [1, 8, 128], strides = [1, 1, 1]} : vector<4x8x128xf32> to vector<1x8x128xf32>
    %182 = vector.shape_cast %181 : vector<1x8x128xf32> to vector<8x128xf32>
    %183 = arith.subf %182, %166 : vector<8x128xf32>
    %184 = math.absf %183 : vector<8x128xf32>
    %185 = arith.addf %180, %184 : vector<8x128xf32>
    %186 = vector.extract_strided_slice %3 {offsets = [3, 0, 0], sizes = [1, 8, 128], strides = [1, 1, 1]} : vector<4x8x128xf32> to vector<1x8x128xf32>
    %187 = vector.shape_cast %186 : vector<1x8x128xf32> to vector<8x128xf32>
    %188 = arith.subf %187, %171 : vector<8x128xf32>
    %189 = math.absf %188 : vector<8x128xf32>
    %190 = arith.addf %185, %189 : vector<8x128xf32>
    %cst_51 = arith.constant 0.000000e+00 : f32
    %191 = vector.broadcast %cst_51 : f32 to vector<8x128xf32>
    %192 = arith.select %125, %190, %191 : vector<8x128xi1>, vector<8x128xf32>
    %cst_52 = arith.constant dense<0.000000e+00> : vector<8xf32>
    %193 = vector.multi_reduction <add>, %192, %cst_52 [1] : vector<8x128xf32> to vector<8xf32>
    %194 = vector.shape_cast %193 : vector<8xf32> to vector<8x1xf32>
    %cst_53 = arith.constant dense<0xFF800000> : vector<8x128xf32>
    %195 = vector.multi_reduction <maximumf>, %4, %cst_53 [0] : vector<8x8x128xf32> to vector<8x128xf32>
    %196 = vector.shape_cast %195 : vector<8x128xf32> to vector<1x8x128xf32>
    %197 = vector.broadcast %196 : vector<1x8x128xf32> to vector<8x8x128xf32>
    %198 = arith.subf %4, %197 : vector<8x8x128xf32>
    %199 = math.exp %198 : vector<8x8x128xf32>
    %cst_54 = arith.constant dense<0.000000e+00> : vector<8x128xf32>
    %200 = vector.multi_reduction <add>, %199, %cst_54 [0] : vector<8x8x128xf32> to vector<8x128xf32>
    %201 = math.log %200 : vector<8x128xf32>
    %202 = arith.addf %201, %195 : vector<8x128xf32>
    %203 = tpu.iota {dimensions = array<i32: 0>} : vector<8x8x128xi32>
    %204 = arith.sitofp %203 : vector<8x8x128xi32> to vector<8x8x128xf32>
    %205 = vector.shape_cast %123 : vector<8x128xf32> to vector<1x8x128xf32>
    %206 = vector.broadcast %205 : vector<1x8x128xf32> to vector<8x8x128xf32>
    %207 = arith.cmpf oeq, %204, %206 : vector<8x8x128xf32>
    %cst_55 = arith.constant 0.000000e+00 : f32
    %208 = vector.broadcast %cst_55 : f32 to vector<8x8x128xf32>
    %209 = arith.select %207, %4, %208 : vector<8x8x128xi1>, vector<8x8x128xf32>
    %cst_56 = arith.constant dense<0.000000e+00> : vector<8x128xf32>
    %210 = vector.multi_reduction <add>, %209, %cst_56 [0] : vector<8x8x128xf32> to vector<8x128xf32>
    %211 = arith.subf %202, %210 : vector<8x128xf32>
    %cst_57 = arith.constant 0.000000e+00 : f32
    %212 = vector.broadcast %cst_57 : f32 to vector<8x128xf32>
    %213 = arith.select %125, %211, %212 : vector<8x128xi1>, vector<8x128xf32>
    %cst_58 = arith.constant dense<0.000000e+00> : vector<8xf32>
    %214 = vector.multi_reduction <add>, %213, %cst_58 [1] : vector<8x128xf32> to vector<8xf32>
    %215 = vector.shape_cast %214 : vector<8xf32> to vector<8x1xf32>
    %cst_59 = arith.constant dense<true> : vector<8x128xi1>
    %216 = arith.xori %125, %cst_59 : vector<8x128xi1>
    %cst_60 = arith.constant 0.000000e+00 : f32
    %217 = vector.broadcast %cst_60 : f32 to vector<8x128xf32>
    %218 = arith.select %216, %211, %217 : vector<8x128xi1>, vector<8x128xf32>
    %cst_61 = arith.constant 3.000000e+00 : f32
    %219 = vector.broadcast %cst_61 : f32 to vector<8x1xf32>
    %220 = arith.mulf %219, %129 : vector<8x1xf32>
    %cst_62 = arith.constant 1.280000e+02 : f32
    %221 = vector.broadcast %cst_62 : f32 to vector<8x1xf32>
    %222 = arith.minimumf %220, %221 : vector<8x1xf32>
    %cst_63 = arith.constant -1.000000e+00 : f32
    %223 = vector.broadcast %cst_63 : f32 to vector<8x1xf32>
    %cst_64 = arith.constant dense<0xFF800000> : vector<8xf32>
    %224 = vector.multi_reduction <maximumf>, %218, %cst_64 [1] : vector<8x128xf32> to vector<8xf32>
    %225 = vector.shape_cast %224 : vector<8xf32> to vector<8x1xf32>
    %c0_i32_65 = arith.constant 0 : i32
    %226 = arith.addf %223, %225 : vector<8x1xf32>
    %cst_66 = arith.constant 5.000000e-01 : f32
    %227 = vector.broadcast %cst_66 : f32 to vector<8x1xf32>
    %228 = arith.mulf %227, %226 : vector<8x1xf32>
    %229 = vector.broadcast %228 : vector<8x1xf32> to vector<8x128xf32>
    %230 = arith.cmpf ogt, %218, %229 : vector<8x128xf32>
    %231 = arith.extui %230 : vector<8x128xi1> to vector<8x128xi32>
    %232 = arith.sitofp %231 : vector<8x128xi32> to vector<8x128xf32>
    %cst_67 = arith.constant dense<0.000000e+00> : vector<8xf32>
    %233 = vector.multi_reduction <add>, %232, %cst_67 [1] : vector<8x128xf32> to vector<8xf32>
    %234 = vector.shape_cast %233 : vector<8xf32> to vector<8x1xf32>
    %235 = arith.cmpf oge, %234, %222 : vector<8x1xf32>
    %236 = arith.select %235, %228, %223 : vector<8x1xi1>, vector<8x1xf32>
    %237 = arith.select %235, %225, %228 : vector<8x1xi1>, vector<8x1xf32>
    %c1_i32 = arith.constant 1 : i32
    %238 = arith.addf %236, %237 : vector<8x1xf32>
    %cst_68 = arith.constant 5.000000e-01 : f32
    %239 = vector.broadcast %cst_68 : f32 to vector<8x1xf32>
    %240 = arith.mulf %239, %238 : vector<8x1xf32>
    %241 = vector.broadcast %240 : vector<8x1xf32> to vector<8x128xf32>
    %242 = arith.cmpf ogt, %218, %241 : vector<8x128xf32>
    %243 = arith.extui %242 : vector<8x128xi1> to vector<8x128xi32>
    %244 = arith.sitofp %243 : vector<8x128xi32> to vector<8x128xf32>
    %cst_69 = arith.constant dense<0.000000e+00> : vector<8xf32>
    %245 = vector.multi_reduction <add>, %244, %cst_69 [1] : vector<8x128xf32> to vector<8xf32>
    %246 = vector.shape_cast %245 : vector<8xf32> to vector<8x1xf32>
    %247 = arith.cmpf oge, %246, %222 : vector<8x1xf32>
    %248 = arith.select %247, %240, %236 : vector<8x1xi1>, vector<8x1xf32>
    %249 = arith.select %247, %237, %240 : vector<8x1xi1>, vector<8x1xf32>
    %c2_i32 = arith.constant 2 : i32
    %250 = arith.addf %248, %249 : vector<8x1xf32>
    %cst_70 = arith.constant 5.000000e-01 : f32
    %251 = vector.broadcast %cst_70 : f32 to vector<8x1xf32>
    %252 = arith.mulf %251, %250 : vector<8x1xf32>
    %253 = vector.broadcast %252 : vector<8x1xf32> to vector<8x128xf32>
    %254 = arith.cmpf ogt, %218, %253 : vector<8x128xf32>
    %255 = arith.extui %254 : vector<8x128xi1> to vector<8x128xi32>
    %256 = arith.sitofp %255 : vector<8x128xi32> to vector<8x128xf32>
    %cst_71 = arith.constant dense<0.000000e+00> : vector<8xf32>
    %257 = vector.multi_reduction <add>, %256, %cst_71 [1] : vector<8x128xf32> to vector<8xf32>
    %258 = vector.shape_cast %257 : vector<8xf32> to vector<8x1xf32>
    %259 = arith.cmpf oge, %258, %222 : vector<8x1xf32>
    %260 = arith.select %259, %252, %248 : vector<8x1xi1>, vector<8x1xf32>
    %261 = arith.select %259, %249, %252 : vector<8x1xi1>, vector<8x1xf32>
    %c3_i32 = arith.constant 3 : i32
    %262 = arith.addf %260, %261 : vector<8x1xf32>
    %cst_72 = arith.constant 5.000000e-01 : f32
    %263 = vector.broadcast %cst_72 : f32 to vector<8x1xf32>
    %264 = arith.mulf %263, %262 : vector<8x1xf32>
    %265 = vector.broadcast %264 : vector<8x1xf32> to vector<8x128xf32>
    %266 = arith.cmpf ogt, %218, %265 : vector<8x128xf32>
    %267 = arith.extui %266 : vector<8x128xi1> to vector<8x128xi32>
    %268 = arith.sitofp %267 : vector<8x128xi32> to vector<8x128xf32>
    %cst_73 = arith.constant dense<0.000000e+00> : vector<8xf32>
    %269 = vector.multi_reduction <add>, %268, %cst_73 [1] : vector<8x128xf32> to vector<8xf32>
    %270 = vector.shape_cast %269 : vector<8xf32> to vector<8x1xf32>
    %271 = arith.cmpf oge, %270, %222 : vector<8x1xf32>
    %272 = arith.select %271, %264, %260 : vector<8x1xi1>, vector<8x1xf32>
    %273 = arith.select %271, %261, %264 : vector<8x1xi1>, vector<8x1xf32>
    %c4_i32 = arith.constant 4 : i32
    %274 = arith.addf %272, %273 : vector<8x1xf32>
    %cst_74 = arith.constant 5.000000e-01 : f32
    %275 = vector.broadcast %cst_74 : f32 to vector<8x1xf32>
    %276 = arith.mulf %275, %274 : vector<8x1xf32>
    %277 = vector.broadcast %276 : vector<8x1xf32> to vector<8x128xf32>
    %278 = arith.cmpf ogt, %218, %277 : vector<8x128xf32>
    %279 = arith.extui %278 : vector<8x128xi1> to vector<8x128xi32>
    %280 = arith.sitofp %279 : vector<8x128xi32> to vector<8x128xf32>
    %cst_75 = arith.constant dense<0.000000e+00> : vector<8xf32>
    %281 = vector.multi_reduction <add>, %280, %cst_75 [1] : vector<8x128xf32> to vector<8xf32>
    %282 = vector.shape_cast %281 : vector<8xf32> to vector<8x1xf32>
    %283 = arith.cmpf oge, %282, %222 : vector<8x1xf32>
    %284 = arith.select %283, %276, %272 : vector<8x1xi1>, vector<8x1xf32>
    %285 = arith.select %283, %273, %276 : vector<8x1xi1>, vector<8x1xf32>
    %c5_i32 = arith.constant 5 : i32
    %286 = arith.addf %284, %285 : vector<8x1xf32>
    %cst_76 = arith.constant 5.000000e-01 : f32
    %287 = vector.broadcast %cst_76 : f32 to vector<8x1xf32>
    %288 = arith.mulf %287, %286 : vector<8x1xf32>
    %289 = vector.broadcast %288 : vector<8x1xf32> to vector<8x128xf32>
    %290 = arith.cmpf ogt, %218, %289 : vector<8x128xf32>
    %291 = arith.extui %290 : vector<8x128xi1> to vector<8x128xi32>
    %292 = arith.sitofp %291 : vector<8x128xi32> to vector<8x128xf32>
    %cst_77 = arith.constant dense<0.000000e+00> : vector<8xf32>
    %293 = vector.multi_reduction <add>, %292, %cst_77 [1] : vector<8x128xf32> to vector<8xf32>
    %294 = vector.shape_cast %293 : vector<8xf32> to vector<8x1xf32>
    %295 = arith.cmpf oge, %294, %222 : vector<8x1xf32>
    %296 = arith.select %295, %288, %284 : vector<8x1xi1>, vector<8x1xf32>
    %297 = arith.select %295, %285, %288 : vector<8x1xi1>, vector<8x1xf32>
    %c6_i32 = arith.constant 6 : i32
    %298 = arith.addf %296, %297 : vector<8x1xf32>
    %cst_78 = arith.constant 5.000000e-01 : f32
    %299 = vector.broadcast %cst_78 : f32 to vector<8x1xf32>
    %300 = arith.mulf %299, %298 : vector<8x1xf32>
    %301 = vector.broadcast %300 : vector<8x1xf32> to vector<8x128xf32>
    %302 = arith.cmpf ogt, %218, %301 : vector<8x128xf32>
    %303 = arith.extui %302 : vector<8x128xi1> to vector<8x128xi32>
    %304 = arith.sitofp %303 : vector<8x128xi32> to vector<8x128xf32>
    %cst_79 = arith.constant dense<0.000000e+00> : vector<8xf32>
    %305 = vector.multi_reduction <add>, %304, %cst_79 [1] : vector<8x128xf32> to vector<8xf32>
    %306 = vector.shape_cast %305 : vector<8xf32> to vector<8x1xf32>
    %307 = arith.cmpf oge, %306, %222 : vector<8x1xf32>
    %308 = arith.select %307, %300, %296 : vector<8x1xi1>, vector<8x1xf32>
    %309 = arith.select %307, %297, %300 : vector<8x1xi1>, vector<8x1xf32>
    %c7_i32 = arith.constant 7 : i32
    %310 = arith.addf %308, %309 : vector<8x1xf32>
    %cst_80 = arith.constant 5.000000e-01 : f32
    %311 = vector.broadcast %cst_80 : f32 to vector<8x1xf32>
    %312 = arith.mulf %311, %310 : vector<8x1xf32>
    %313 = vector.broadcast %312 : vector<8x1xf32> to vector<8x128xf32>
    %314 = arith.cmpf ogt, %218, %313 : vector<8x128xf32>
    %315 = arith.extui %314 : vector<8x128xi1> to vector<8x128xi32>
    %316 = arith.sitofp %315 : vector<8x128xi32> to vector<8x128xf32>
    %cst_81 = arith.constant dense<0.000000e+00> : vector<8xf32>
    %317 = vector.multi_reduction <add>, %316, %cst_81 [1] : vector<8x128xf32> to vector<8xf32>
    %318 = vector.shape_cast %317 : vector<8xf32> to vector<8x1xf32>
    %319 = arith.cmpf oge, %318, %222 : vector<8x1xf32>
    %320 = arith.select %319, %312, %308 : vector<8x1xi1>, vector<8x1xf32>
    %321 = arith.select %319, %309, %312 : vector<8x1xi1>, vector<8x1xf32>
    %c8_i32_82 = arith.constant 8 : i32
    %322 = arith.addf %320, %321 : vector<8x1xf32>
    %cst_83 = arith.constant 5.000000e-01 : f32
    %323 = vector.broadcast %cst_83 : f32 to vector<8x1xf32>
    %324 = arith.mulf %323, %322 : vector<8x1xf32>
    %325 = vector.broadcast %324 : vector<8x1xf32> to vector<8x128xf32>
    %326 = arith.cmpf ogt, %218, %325 : vector<8x128xf32>
    %327 = arith.extui %326 : vector<8x128xi1> to vector<8x128xi32>
    %328 = arith.sitofp %327 : vector<8x128xi32> to vector<8x128xf32>
    %cst_84 = arith.constant dense<0.000000e+00> : vector<8xf32>
    %329 = vector.multi_reduction <add>, %328, %cst_84 [1] : vector<8x128xf32> to vector<8xf32>
    %330 = vector.shape_cast %329 : vector<8xf32> to vector<8x1xf32>
    %331 = arith.cmpf oge, %330, %222 : vector<8x1xf32>
    %332 = arith.select %331, %324, %320 : vector<8x1xi1>, vector<8x1xf32>
    %333 = arith.select %331, %321, %324 : vector<8x1xi1>, vector<8x1xf32>
    %c9_i32 = arith.constant 9 : i32
    %334 = arith.addf %332, %333 : vector<8x1xf32>
    %cst_85 = arith.constant 5.000000e-01 : f32
    %335 = vector.broadcast %cst_85 : f32 to vector<8x1xf32>
    %336 = arith.mulf %335, %334 : vector<8x1xf32>
    %337 = vector.broadcast %336 : vector<8x1xf32> to vector<8x128xf32>
    %338 = arith.cmpf ogt, %218, %337 : vector<8x128xf32>
    %339 = arith.extui %338 : vector<8x128xi1> to vector<8x128xi32>
    %340 = arith.sitofp %339 : vector<8x128xi32> to vector<8x128xf32>
    %cst_86 = arith.constant dense<0.000000e+00> : vector<8xf32>
    %341 = vector.multi_reduction <add>, %340, %cst_86 [1] : vector<8x128xf32> to vector<8xf32>
    %342 = vector.shape_cast %341 : vector<8xf32> to vector<8x1xf32>
    %343 = arith.cmpf oge, %342, %222 : vector<8x1xf32>
    %344 = arith.select %343, %336, %332 : vector<8x1xi1>, vector<8x1xf32>
    %345 = arith.select %343, %333, %336 : vector<8x1xi1>, vector<8x1xf32>
    %c10_i32 = arith.constant 10 : i32
    %346 = arith.addf %344, %345 : vector<8x1xf32>
    %cst_87 = arith.constant 5.000000e-01 : f32
    %347 = vector.broadcast %cst_87 : f32 to vector<8x1xf32>
    %348 = arith.mulf %347, %346 : vector<8x1xf32>
    %349 = vector.broadcast %348 : vector<8x1xf32> to vector<8x128xf32>
    %350 = arith.cmpf ogt, %218, %349 : vector<8x128xf32>
    %351 = arith.extui %350 : vector<8x128xi1> to vector<8x128xi32>
    %352 = arith.sitofp %351 : vector<8x128xi32> to vector<8x128xf32>
    %cst_88 = arith.constant dense<0.000000e+00> : vector<8xf32>
    %353 = vector.multi_reduction <add>, %352, %cst_88 [1] : vector<8x128xf32> to vector<8xf32>
    %354 = vector.shape_cast %353 : vector<8xf32> to vector<8x1xf32>
    %355 = arith.cmpf oge, %354, %222 : vector<8x1xf32>
    %356 = arith.select %355, %348, %344 : vector<8x1xi1>, vector<8x1xf32>
    %357 = arith.select %355, %345, %348 : vector<8x1xi1>, vector<8x1xf32>
    %c11_i32 = arith.constant 11 : i32
    %358 = arith.addf %356, %357 : vector<8x1xf32>
    %cst_89 = arith.constant 5.000000e-01 : f32
    %359 = vector.broadcast %cst_89 : f32 to vector<8x1xf32>
    %360 = arith.mulf %359, %358 : vector<8x1xf32>
    %361 = vector.broadcast %360 : vector<8x1xf32> to vector<8x128xf32>
    %362 = arith.cmpf ogt, %218, %361 : vector<8x128xf32>
    %363 = arith.extui %362 : vector<8x128xi1> to vector<8x128xi32>
    %364 = arith.sitofp %363 : vector<8x128xi32> to vector<8x128xf32>
    %cst_90 = arith.constant dense<0.000000e+00> : vector<8xf32>
    %365 = vector.multi_reduction <add>, %364, %cst_90 [1] : vector<8x128xf32> to vector<8xf32>
    %366 = vector.shape_cast %365 : vector<8xf32> to vector<8x1xf32>
    %367 = arith.cmpf oge, %366, %222 : vector<8x1xf32>
    %368 = arith.select %367, %360, %356 : vector<8x1xi1>, vector<8x1xf32>
    %369 = arith.select %367, %357, %360 : vector<8x1xi1>, vector<8x1xf32>
    %c12_i32 = arith.constant 12 : i32
    %370 = arith.addf %368, %369 : vector<8x1xf32>
    %cst_91 = arith.constant 5.000000e-01 : f32
    %371 = vector.broadcast %cst_91 : f32 to vector<8x1xf32>
    %372 = arith.mulf %371, %370 : vector<8x1xf32>
    %373 = vector.broadcast %372 : vector<8x1xf32> to vector<8x128xf32>
    %374 = arith.cmpf ogt, %218, %373 : vector<8x128xf32>
    %375 = arith.extui %374 : vector<8x128xi1> to vector<8x128xi32>
    %376 = arith.sitofp %375 : vector<8x128xi32> to vector<8x128xf32>
    %cst_92 = arith.constant dense<0.000000e+00> : vector<8xf32>
    %377 = vector.multi_reduction <add>, %376, %cst_92 [1] : vector<8x128xf32> to vector<8xf32>
    %378 = vector.shape_cast %377 : vector<8xf32> to vector<8x1xf32>
    %379 = arith.cmpf oge, %378, %222 : vector<8x1xf32>
    %380 = arith.select %379, %372, %368 : vector<8x1xi1>, vector<8x1xf32>
    %381 = arith.select %379, %369, %372 : vector<8x1xi1>, vector<8x1xf32>
    %c13_i32 = arith.constant 13 : i32
    %382 = arith.addf %380, %381 : vector<8x1xf32>
    %cst_93 = arith.constant 5.000000e-01 : f32
    %383 = vector.broadcast %cst_93 : f32 to vector<8x1xf32>
    %384 = arith.mulf %383, %382 : vector<8x1xf32>
    %385 = vector.broadcast %384 : vector<8x1xf32> to vector<8x128xf32>
    %386 = arith.cmpf ogt, %218, %385 : vector<8x128xf32>
    %387 = arith.extui %386 : vector<8x128xi1> to vector<8x128xi32>
    %388 = arith.sitofp %387 : vector<8x128xi32> to vector<8x128xf32>
    %cst_94 = arith.constant dense<0.000000e+00> : vector<8xf32>
    %389 = vector.multi_reduction <add>, %388, %cst_94 [1] : vector<8x128xf32> to vector<8xf32>
    %390 = vector.shape_cast %389 : vector<8xf32> to vector<8x1xf32>
    %391 = arith.cmpf oge, %390, %222 : vector<8x1xf32>
    %392 = arith.select %391, %384, %380 : vector<8x1xi1>, vector<8x1xf32>
    %393 = arith.select %391, %381, %384 : vector<8x1xi1>, vector<8x1xf32>
    %c14_i32 = arith.constant 14 : i32
    %394 = arith.addf %392, %393 : vector<8x1xf32>
    %cst_95 = arith.constant 5.000000e-01 : f32
    %395 = vector.broadcast %cst_95 : f32 to vector<8x1xf32>
    %396 = arith.mulf %395, %394 : vector<8x1xf32>
    %397 = vector.broadcast %396 : vector<8x1xf32> to vector<8x128xf32>
    %398 = arith.cmpf ogt, %218, %397 : vector<8x128xf32>
    %399 = arith.extui %398 : vector<8x128xi1> to vector<8x128xi32>
    %400 = arith.sitofp %399 : vector<8x128xi32> to vector<8x128xf32>
    %cst_96 = arith.constant dense<0.000000e+00> : vector<8xf32>
    %401 = vector.multi_reduction <add>, %400, %cst_96 [1] : vector<8x128xf32> to vector<8xf32>
    %402 = vector.shape_cast %401 : vector<8xf32> to vector<8x1xf32>
    %403 = arith.cmpf oge, %402, %222 : vector<8x1xf32>
    %404 = arith.select %403, %396, %392 : vector<8x1xi1>, vector<8x1xf32>
    %405 = arith.select %403, %393, %396 : vector<8x1xi1>, vector<8x1xf32>
    %c15_i32 = arith.constant 15 : i32
    %406 = arith.addf %404, %405 : vector<8x1xf32>
    %cst_97 = arith.constant 5.000000e-01 : f32
    %407 = vector.broadcast %cst_97 : f32 to vector<8x1xf32>
    %408 = arith.mulf %407, %406 : vector<8x1xf32>
    %409 = vector.broadcast %408 : vector<8x1xf32> to vector<8x128xf32>
    %410 = arith.cmpf ogt, %218, %409 : vector<8x128xf32>
    %411 = arith.extui %410 : vector<8x128xi1> to vector<8x128xi32>
    %412 = arith.sitofp %411 : vector<8x128xi32> to vector<8x128xf32>
    %cst_98 = arith.constant dense<0.000000e+00> : vector<8xf32>
    %413 = vector.multi_reduction <add>, %412, %cst_98 [1] : vector<8x128xf32> to vector<8xf32>
    %414 = vector.shape_cast %413 : vector<8xf32> to vector<8x1xf32>
    %415 = arith.cmpf oge, %414, %222 : vector<8x1xf32>
    %416 = arith.select %415, %408, %404 : vector<8x1xi1>, vector<8x1xf32>
    %417 = arith.select %415, %405, %408 : vector<8x1xi1>, vector<8x1xf32>
    %c16_i32 = arith.constant 16 : i32
    %418 = arith.addf %416, %417 : vector<8x1xf32>
    %cst_99 = arith.constant 5.000000e-01 : f32
    %419 = vector.broadcast %cst_99 : f32 to vector<8x1xf32>
    %420 = arith.mulf %419, %418 : vector<8x1xf32>
    %421 = vector.broadcast %420 : vector<8x1xf32> to vector<8x128xf32>
    %422 = arith.cmpf ogt, %218, %421 : vector<8x128xf32>
    %423 = arith.extui %422 : vector<8x128xi1> to vector<8x128xi32>
    %424 = arith.sitofp %423 : vector<8x128xi32> to vector<8x128xf32>
    %cst_100 = arith.constant dense<0.000000e+00> : vector<8xf32>
    %425 = vector.multi_reduction <add>, %424, %cst_100 [1] : vector<8x128xf32> to vector<8xf32>
    %426 = vector.shape_cast %425 : vector<8xf32> to vector<8x1xf32>
    %427 = arith.cmpf oge, %426, %222 : vector<8x1xf32>
    %428 = arith.select %427, %420, %416 : vector<8x1xi1>, vector<8x1xf32>
    %429 = arith.select %427, %417, %420 : vector<8x1xi1>, vector<8x1xf32>
    %c17_i32 = arith.constant 17 : i32
    %430 = arith.addf %428, %429 : vector<8x1xf32>
    %cst_101 = arith.constant 5.000000e-01 : f32
    %431 = vector.broadcast %cst_101 : f32 to vector<8x1xf32>
    %432 = arith.mulf %431, %430 : vector<8x1xf32>
    %433 = vector.broadcast %432 : vector<8x1xf32> to vector<8x128xf32>
    %434 = arith.cmpf ogt, %218, %433 : vector<8x128xf32>
    %435 = arith.extui %434 : vector<8x128xi1> to vector<8x128xi32>
    %436 = arith.sitofp %435 : vector<8x128xi32> to vector<8x128xf32>
    %cst_102 = arith.constant dense<0.000000e+00> : vector<8xf32>
    %437 = vector.multi_reduction <add>, %436, %cst_102 [1] : vector<8x128xf32> to vector<8xf32>
    %438 = vector.shape_cast %437 : vector<8xf32> to vector<8x1xf32>
    %439 = arith.cmpf oge, %438, %222 : vector<8x1xf32>
    %440 = arith.select %439, %432, %428 : vector<8x1xi1>, vector<8x1xf32>
    %441 = arith.select %439, %429, %432 : vector<8x1xi1>, vector<8x1xf32>
    %c18_i32 = arith.constant 18 : i32
    %442 = arith.addf %440, %441 : vector<8x1xf32>
    %cst_103 = arith.constant 5.000000e-01 : f32
    %443 = vector.broadcast %cst_103 : f32 to vector<8x1xf32>
    %444 = arith.mulf %443, %442 : vector<8x1xf32>
    %445 = vector.broadcast %444 : vector<8x1xf32> to vector<8x128xf32>
    %446 = arith.cmpf ogt, %218, %445 : vector<8x128xf32>
    %447 = arith.extui %446 : vector<8x128xi1> to vector<8x128xi32>
    %448 = arith.sitofp %447 : vector<8x128xi32> to vector<8x128xf32>
    %cst_104 = arith.constant dense<0.000000e+00> : vector<8xf32>
    %449 = vector.multi_reduction <add>, %448, %cst_104 [1] : vector<8x128xf32> to vector<8xf32>
    %450 = vector.shape_cast %449 : vector<8xf32> to vector<8x1xf32>
    %451 = arith.cmpf oge, %450, %222 : vector<8x1xf32>
    %452 = arith.select %451, %444, %440 : vector<8x1xi1>, vector<8x1xf32>
    %453 = arith.select %451, %441, %444 : vector<8x1xi1>, vector<8x1xf32>
    %c19_i32 = arith.constant 19 : i32
    %454 = arith.addf %452, %453 : vector<8x1xf32>
    %cst_105 = arith.constant 5.000000e-01 : f32
    %455 = vector.broadcast %cst_105 : f32 to vector<8x1xf32>
    %456 = arith.mulf %455, %454 : vector<8x1xf32>
    %457 = vector.broadcast %456 : vector<8x1xf32> to vector<8x128xf32>
    %458 = arith.cmpf ogt, %218, %457 : vector<8x128xf32>
    %459 = arith.extui %458 : vector<8x128xi1> to vector<8x128xi32>
    %460 = arith.sitofp %459 : vector<8x128xi32> to vector<8x128xf32>
    %cst_106 = arith.constant dense<0.000000e+00> : vector<8xf32>
    %461 = vector.multi_reduction <add>, %460, %cst_106 [1] : vector<8x128xf32> to vector<8xf32>
    %462 = vector.shape_cast %461 : vector<8xf32> to vector<8x1xf32>
    %463 = arith.cmpf oge, %462, %222 : vector<8x1xf32>
    %464 = arith.select %463, %456, %452 : vector<8x1xi1>, vector<8x1xf32>
    %465 = arith.select %463, %453, %456 : vector<8x1xi1>, vector<8x1xf32>
    %c20_i32 = arith.constant 20 : i32
    %466 = arith.addf %464, %465 : vector<8x1xf32>
    %cst_107 = arith.constant 5.000000e-01 : f32
    %467 = vector.broadcast %cst_107 : f32 to vector<8x1xf32>
    %468 = arith.mulf %467, %466 : vector<8x1xf32>
    %469 = vector.broadcast %468 : vector<8x1xf32> to vector<8x128xf32>
    %470 = arith.cmpf ogt, %218, %469 : vector<8x128xf32>
    %471 = arith.extui %470 : vector<8x128xi1> to vector<8x128xi32>
    %472 = arith.sitofp %471 : vector<8x128xi32> to vector<8x128xf32>
    %cst_108 = arith.constant dense<0.000000e+00> : vector<8xf32>
    %473 = vector.multi_reduction <add>, %472, %cst_108 [1] : vector<8x128xf32> to vector<8xf32>
    %474 = vector.shape_cast %473 : vector<8xf32> to vector<8x1xf32>
    %475 = arith.cmpf oge, %474, %222 : vector<8x1xf32>
    %476 = arith.select %475, %468, %464 : vector<8x1xi1>, vector<8x1xf32>
    %477 = arith.select %475, %465, %468 : vector<8x1xi1>, vector<8x1xf32>
    %c21_i32 = arith.constant 21 : i32
    %478 = arith.addf %476, %477 : vector<8x1xf32>
    %cst_109 = arith.constant 5.000000e-01 : f32
    %479 = vector.broadcast %cst_109 : f32 to vector<8x1xf32>
    %480 = arith.mulf %479, %478 : vector<8x1xf32>
    %481 = vector.broadcast %480 : vector<8x1xf32> to vector<8x128xf32>
    %482 = arith.cmpf ogt, %218, %481 : vector<8x128xf32>
    %483 = arith.extui %482 : vector<8x128xi1> to vector<8x128xi32>
    %484 = arith.sitofp %483 : vector<8x128xi32> to vector<8x128xf32>
    %cst_110 = arith.constant dense<0.000000e+00> : vector<8xf32>
    %485 = vector.multi_reduction <add>, %484, %cst_110 [1] : vector<8x128xf32> to vector<8xf32>
    %486 = vector.shape_cast %485 : vector<8xf32> to vector<8x1xf32>
    %487 = arith.cmpf oge, %486, %222 : vector<8x1xf32>
    %488 = arith.select %487, %480, %476 : vector<8x1xi1>, vector<8x1xf32>
    %489 = arith.select %487, %477, %480 : vector<8x1xi1>, vector<8x1xf32>
    %c22_i32 = arith.constant 22 : i32
    %490 = arith.addf %488, %489 : vector<8x1xf32>
    %cst_111 = arith.constant 5.000000e-01 : f32
    %491 = vector.broadcast %cst_111 : f32 to vector<8x1xf32>
    %492 = arith.mulf %491, %490 : vector<8x1xf32>
    %493 = vector.broadcast %492 : vector<8x1xf32> to vector<8x128xf32>
    %494 = arith.cmpf ogt, %218, %493 : vector<8x128xf32>
    %495 = arith.extui %494 : vector<8x128xi1> to vector<8x128xi32>
    %496 = arith.sitofp %495 : vector<8x128xi32> to vector<8x128xf32>
    %cst_112 = arith.constant dense<0.000000e+00> : vector<8xf32>
    %497 = vector.multi_reduction <add>, %496, %cst_112 [1] : vector<8x128xf32> to vector<8xf32>
    %498 = vector.shape_cast %497 : vector<8xf32> to vector<8x1xf32>
    %499 = arith.cmpf oge, %498, %222 : vector<8x1xf32>
    %500 = arith.select %499, %492, %488 : vector<8x1xi1>, vector<8x1xf32>
    %501 = arith.select %499, %489, %492 : vector<8x1xi1>, vector<8x1xf32>
    %c23_i32 = arith.constant 23 : i32
    %502 = arith.addf %500, %501 : vector<8x1xf32>
    %cst_113 = arith.constant 5.000000e-01 : f32
    %503 = vector.broadcast %cst_113 : f32 to vector<8x1xf32>
    %504 = arith.mulf %503, %502 : vector<8x1xf32>
    %505 = vector.broadcast %504 : vector<8x1xf32> to vector<8x128xf32>
    %506 = arith.cmpf ogt, %218, %505 : vector<8x128xf32>
    %507 = arith.extui %506 : vector<8x128xi1> to vector<8x128xi32>
    %508 = arith.sitofp %507 : vector<8x128xi32> to vector<8x128xf32>
    %cst_114 = arith.constant dense<0.000000e+00> : vector<8xf32>
    %509 = vector.multi_reduction <add>, %508, %cst_114 [1] : vector<8x128xf32> to vector<8xf32>
    %510 = vector.shape_cast %509 : vector<8xf32> to vector<8x1xf32>
    %511 = arith.cmpf oge, %510, %222 : vector<8x1xf32>
    %512 = arith.select %511, %504, %500 : vector<8x1xi1>, vector<8x1xf32>
    %513 = arith.select %511, %501, %504 : vector<8x1xi1>, vector<8x1xf32>
    %c24_i32 = arith.constant 24 : i32
    %514 = arith.addf %512, %513 : vector<8x1xf32>
    %cst_115 = arith.constant 5.000000e-01 : f32
    %515 = vector.broadcast %cst_115 : f32 to vector<8x1xf32>
    %516 = arith.mulf %515, %514 : vector<8x1xf32>
    %517 = vector.broadcast %516 : vector<8x1xf32> to vector<8x128xf32>
    %518 = arith.cmpf ogt, %218, %517 : vector<8x128xf32>
    %519 = arith.extui %518 : vector<8x128xi1> to vector<8x128xi32>
    %520 = arith.sitofp %519 : vector<8x128xi32> to vector<8x128xf32>
    %cst_116 = arith.constant dense<0.000000e+00> : vector<8xf32>
    %521 = vector.multi_reduction <add>, %520, %cst_116 [1] : vector<8x128xf32> to vector<8xf32>
    %522 = vector.shape_cast %521 : vector<8xf32> to vector<8x1xf32>
    %523 = arith.cmpf oge, %522, %222 : vector<8x1xf32>
    %524 = arith.select %523, %516, %512 : vector<8x1xi1>, vector<8x1xf32>
    %525 = arith.select %523, %513, %516 : vector<8x1xi1>, vector<8x1xf32>
    %c25_i32 = arith.constant 25 : i32
    %526 = arith.addf %524, %525 : vector<8x1xf32>
    %cst_117 = arith.constant 5.000000e-01 : f32
    %527 = vector.broadcast %cst_117 : f32 to vector<8x1xf32>
    %528 = arith.mulf %527, %526 : vector<8x1xf32>
    %529 = vector.broadcast %528 : vector<8x1xf32> to vector<8x128xf32>
    %530 = arith.cmpf ogt, %218, %529 : vector<8x128xf32>
    %531 = arith.extui %530 : vector<8x128xi1> to vector<8x128xi32>
    %532 = arith.sitofp %531 : vector<8x128xi32> to vector<8x128xf32>
    %cst_118 = arith.constant dense<0.000000e+00> : vector<8xf32>
    %533 = vector.multi_reduction <add>, %532, %cst_118 [1] : vector<8x128xf32> to vector<8xf32>
    %534 = vector.shape_cast %533 : vector<8xf32> to vector<8x1xf32>
    %535 = arith.cmpf oge, %534, %222 : vector<8x1xf32>
    %536 = arith.select %535, %528, %524 : vector<8x1xi1>, vector<8x1xf32>
    %537 = arith.select %535, %525, %528 : vector<8x1xi1>, vector<8x1xf32>
    %c26_i32 = arith.constant 26 : i32
    %538 = arith.addf %536, %537 : vector<8x1xf32>
    %cst_119 = arith.constant 5.000000e-01 : f32
    %539 = vector.broadcast %cst_119 : f32 to vector<8x1xf32>
    %540 = arith.mulf %539, %538 : vector<8x1xf32>
    %541 = vector.broadcast %540 : vector<8x1xf32> to vector<8x128xf32>
    %542 = arith.cmpf ogt, %218, %541 : vector<8x128xf32>
    %543 = arith.extui %542 : vector<8x128xi1> to vector<8x128xi32>
    %544 = arith.sitofp %543 : vector<8x128xi32> to vector<8x128xf32>
    %cst_120 = arith.constant dense<0.000000e+00> : vector<8xf32>
    %545 = vector.multi_reduction <add>, %544, %cst_120 [1] : vector<8x128xf32> to vector<8xf32>
    %546 = vector.shape_cast %545 : vector<8xf32> to vector<8x1xf32>
    %547 = arith.cmpf oge, %546, %222 : vector<8x1xf32>
    %548 = arith.select %547, %540, %536 : vector<8x1xi1>, vector<8x1xf32>
    %549 = arith.select %547, %537, %540 : vector<8x1xi1>, vector<8x1xf32>
    %c27_i32 = arith.constant 27 : i32
    %550 = arith.addf %548, %549 : vector<8x1xf32>
    %cst_121 = arith.constant 5.000000e-01 : f32
    %551 = vector.broadcast %cst_121 : f32 to vector<8x1xf32>
    %552 = arith.mulf %551, %550 : vector<8x1xf32>
    %553 = vector.broadcast %552 : vector<8x1xf32> to vector<8x128xf32>
    %554 = arith.cmpf ogt, %218, %553 : vector<8x128xf32>
    %555 = arith.extui %554 : vector<8x128xi1> to vector<8x128xi32>
    %556 = arith.sitofp %555 : vector<8x128xi32> to vector<8x128xf32>
    %cst_122 = arith.constant dense<0.000000e+00> : vector<8xf32>
    %557 = vector.multi_reduction <add>, %556, %cst_122 [1] : vector<8x128xf32> to vector<8xf32>
    %558 = vector.shape_cast %557 : vector<8xf32> to vector<8x1xf32>
    %559 = arith.cmpf oge, %558, %222 : vector<8x1xf32>
    %560 = arith.select %559, %552, %548 : vector<8x1xi1>, vector<8x1xf32>
    %561 = arith.select %559, %549, %552 : vector<8x1xi1>, vector<8x1xf32>
    %c28_i32 = arith.constant 28 : i32
    %562 = arith.addf %560, %561 : vector<8x1xf32>
    %cst_123 = arith.constant 5.000000e-01 : f32
    %563 = vector.broadcast %cst_123 : f32 to vector<8x1xf32>
    %564 = arith.mulf %563, %562 : vector<8x1xf32>
    %565 = vector.broadcast %564 : vector<8x1xf32> to vector<8x128xf32>
    %566 = arith.cmpf ogt, %218, %565 : vector<8x128xf32>
    %567 = arith.extui %566 : vector<8x128xi1> to vector<8x128xi32>
    %568 = arith.sitofp %567 : vector<8x128xi32> to vector<8x128xf32>
    %cst_124 = arith.constant dense<0.000000e+00> : vector<8xf32>
    %569 = vector.multi_reduction <add>, %568, %cst_124 [1] : vector<8x128xf32> to vector<8xf32>
    %570 = vector.shape_cast %569 : vector<8xf32> to vector<8x1xf32>
    %571 = arith.cmpf oge, %570, %222 : vector<8x1xf32>
    %572 = arith.select %571, %564, %560 : vector<8x1xi1>, vector<8x1xf32>
    %573 = arith.select %571, %561, %564 : vector<8x1xi1>, vector<8x1xf32>
    %c29_i32 = arith.constant 29 : i32
    %574 = arith.addf %572, %573 : vector<8x1xf32>
    %cst_125 = arith.constant 5.000000e-01 : f32
    %575 = vector.broadcast %cst_125 : f32 to vector<8x1xf32>
    %576 = arith.mulf %575, %574 : vector<8x1xf32>
    %577 = vector.broadcast %576 : vector<8x1xf32> to vector<8x128xf32>
    %578 = arith.cmpf ogt, %218, %577 : vector<8x128xf32>
    %579 = arith.extui %578 : vector<8x128xi1> to vector<8x128xi32>
    %580 = arith.sitofp %579 : vector<8x128xi32> to vector<8x128xf32>
    %cst_126 = arith.constant dense<0.000000e+00> : vector<8xf32>
    %581 = vector.multi_reduction <add>, %580, %cst_126 [1] : vector<8x128xf32> to vector<8xf32>
    %582 = vector.shape_cast %581 : vector<8xf32> to vector<8x1xf32>
    %583 = arith.cmpf oge, %582, %222 : vector<8x1xf32>
    %584 = arith.select %583, %576, %572 : vector<8x1xi1>, vector<8x1xf32>
    %585 = arith.select %583, %573, %576 : vector<8x1xi1>, vector<8x1xf32>
    %c30_i32 = arith.constant 30 : i32
    %586 = arith.addf %584, %585 : vector<8x1xf32>
    %cst_127 = arith.constant 5.000000e-01 : f32
    %587 = vector.broadcast %cst_127 : f32 to vector<8x1xf32>
    %588 = arith.mulf %587, %586 : vector<8x1xf32>
    %589 = vector.broadcast %588 : vector<8x1xf32> to vector<8x128xf32>
    %590 = arith.cmpf ogt, %218, %589 : vector<8x128xf32>
    %591 = arith.extui %590 : vector<8x128xi1> to vector<8x128xi32>
    %592 = arith.sitofp %591 : vector<8x128xi32> to vector<8x128xf32>
    %cst_128 = arith.constant dense<0.000000e+00> : vector<8xf32>
    %593 = vector.multi_reduction <add>, %592, %cst_128 [1] : vector<8x128xf32> to vector<8xf32>
    %594 = vector.shape_cast %593 : vector<8xf32> to vector<8x1xf32>
    %595 = arith.cmpf oge, %594, %222 : vector<8x1xf32>
    %596 = arith.select %595, %588, %584 : vector<8x1xi1>, vector<8x1xf32>
    %597 = arith.select %595, %585, %588 : vector<8x1xi1>, vector<8x1xf32>
    %c31_i32 = arith.constant 31 : i32
    %598 = arith.addf %596, %597 : vector<8x1xf32>
    %cst_129 = arith.constant 5.000000e-01 : f32
    %599 = vector.broadcast %cst_129 : f32 to vector<8x1xf32>
    %600 = arith.mulf %599, %598 : vector<8x1xf32>
    %601 = vector.broadcast %600 : vector<8x1xf32> to vector<8x128xf32>
    %602 = arith.cmpf ogt, %218, %601 : vector<8x128xf32>
    %603 = arith.extui %602 : vector<8x128xi1> to vector<8x128xi32>
    %604 = arith.sitofp %603 : vector<8x128xi32> to vector<8x128xf32>
    %cst_130 = arith.constant dense<0.000000e+00> : vector<8xf32>
    %605 = vector.multi_reduction <add>, %604, %cst_130 [1] : vector<8x128xf32> to vector<8xf32>
    %606 = vector.shape_cast %605 : vector<8xf32> to vector<8x1xf32>
    %607 = arith.cmpf oge, %606, %222 : vector<8x1xf32>
    %608 = arith.select %607, %600, %596 : vector<8x1xi1>, vector<8x1xf32>
    %609 = arith.select %607, %597, %600 : vector<8x1xi1>, vector<8x1xf32>
    %c32_i32 = arith.constant 32 : i32
    %610 = arith.addf %608, %609 : vector<8x1xf32>
    %cst_131 = arith.constant 5.000000e-01 : f32
    %611 = vector.broadcast %cst_131 : f32 to vector<8x1xf32>
    %612 = arith.mulf %611, %610 : vector<8x1xf32>
    %613 = vector.broadcast %612 : vector<8x1xf32> to vector<8x128xf32>
    %614 = arith.cmpf ogt, %218, %613 : vector<8x128xf32>
    %615 = arith.extui %614 : vector<8x128xi1> to vector<8x128xi32>
    %616 = arith.sitofp %615 : vector<8x128xi32> to vector<8x128xf32>
    %cst_132 = arith.constant dense<0.000000e+00> : vector<8xf32>
    %617 = vector.multi_reduction <add>, %616, %cst_132 [1] : vector<8x128xf32> to vector<8xf32>
    %618 = vector.shape_cast %617 : vector<8xf32> to vector<8x1xf32>
    %619 = arith.cmpf oge, %618, %222 : vector<8x1xf32>
    %620 = arith.select %619, %612, %608 : vector<8x1xi1>, vector<8x1xf32>
    %621 = arith.select %619, %609, %612 : vector<8x1xi1>, vector<8x1xf32>
    %c33_i32 = arith.constant 33 : i32
    %622 = arith.addf %620, %621 : vector<8x1xf32>
    %cst_133 = arith.constant 5.000000e-01 : f32
    %623 = vector.broadcast %cst_133 : f32 to vector<8x1xf32>
    %624 = arith.mulf %623, %622 : vector<8x1xf32>
    %625 = vector.broadcast %624 : vector<8x1xf32> to vector<8x128xf32>
    %626 = arith.cmpf ogt, %218, %625 : vector<8x128xf32>
    %627 = arith.extui %626 : vector<8x128xi1> to vector<8x128xi32>
    %628 = arith.sitofp %627 : vector<8x128xi32> to vector<8x128xf32>
    %cst_134 = arith.constant dense<0.000000e+00> : vector<8xf32>
    %629 = vector.multi_reduction <add>, %628, %cst_134 [1] : vector<8x128xf32> to vector<8xf32>
    %630 = vector.shape_cast %629 : vector<8xf32> to vector<8x1xf32>
    %631 = arith.cmpf oge, %630, %222 : vector<8x1xf32>
    %632 = arith.select %631, %624, %620 : vector<8x1xi1>, vector<8x1xf32>
    %633 = arith.select %631, %621, %624 : vector<8x1xi1>, vector<8x1xf32>
    %c34_i32 = arith.constant 34 : i32
    %634 = arith.addf %632, %633 : vector<8x1xf32>
    %cst_135 = arith.constant 5.000000e-01 : f32
    %635 = vector.broadcast %cst_135 : f32 to vector<8x1xf32>
    %636 = arith.mulf %635, %634 : vector<8x1xf32>
    %637 = vector.broadcast %636 : vector<8x1xf32> to vector<8x128xf32>
    %638 = arith.cmpf ogt, %218, %637 : vector<8x128xf32>
    %639 = arith.extui %638 : vector<8x128xi1> to vector<8x128xi32>
    %640 = arith.sitofp %639 : vector<8x128xi32> to vector<8x128xf32>
    %cst_136 = arith.constant dense<0.000000e+00> : vector<8xf32>
    %641 = vector.multi_reduction <add>, %640, %cst_136 [1] : vector<8x128xf32> to vector<8xf32>
    %642 = vector.shape_cast %641 : vector<8xf32> to vector<8x1xf32>
    %643 = arith.cmpf oge, %642, %222 : vector<8x1xf32>
    %644 = arith.select %643, %636, %632 : vector<8x1xi1>, vector<8x1xf32>
    %645 = arith.select %643, %633, %636 : vector<8x1xi1>, vector<8x1xf32>
    %c35_i32 = arith.constant 35 : i32
    %646 = arith.addf %644, %645 : vector<8x1xf32>
    %cst_137 = arith.constant 5.000000e-01 : f32
    %647 = vector.broadcast %cst_137 : f32 to vector<8x1xf32>
    %648 = arith.mulf %647, %646 : vector<8x1xf32>
    %649 = vector.broadcast %648 : vector<8x1xf32> to vector<8x128xf32>
    %650 = arith.cmpf ogt, %218, %649 : vector<8x128xf32>
    %651 = arith.extui %650 : vector<8x128xi1> to vector<8x128xi32>
    %652 = arith.sitofp %651 : vector<8x128xi32> to vector<8x128xf32>
    %cst_138 = arith.constant dense<0.000000e+00> : vector<8xf32>
    %653 = vector.multi_reduction <add>, %652, %cst_138 [1] : vector<8x128xf32> to vector<8xf32>
    %654 = vector.shape_cast %653 : vector<8xf32> to vector<8x1xf32>
    %655 = arith.cmpf oge, %654, %222 : vector<8x1xf32>
    %656 = arith.select %655, %648, %644 : vector<8x1xi1>, vector<8x1xf32>
    %657 = arith.select %655, %645, %648 : vector<8x1xi1>, vector<8x1xf32>
    %c36_i32 = arith.constant 36 : i32
    %658 = arith.addf %656, %657 : vector<8x1xf32>
    %cst_139 = arith.constant 5.000000e-01 : f32
    %659 = vector.broadcast %cst_139 : f32 to vector<8x1xf32>
    %660 = arith.mulf %659, %658 : vector<8x1xf32>
    %661 = vector.broadcast %660 : vector<8x1xf32> to vector<8x128xf32>
    %662 = arith.cmpf ogt, %218, %661 : vector<8x128xf32>
    %663 = arith.extui %662 : vector<8x128xi1> to vector<8x128xi32>
    %664 = arith.sitofp %663 : vector<8x128xi32> to vector<8x128xf32>
    %cst_140 = arith.constant dense<0.000000e+00> : vector<8xf32>
    %665 = vector.multi_reduction <add>, %664, %cst_140 [1] : vector<8x128xf32> to vector<8xf32>
    %666 = vector.shape_cast %665 : vector<8xf32> to vector<8x1xf32>
    %667 = arith.cmpf oge, %666, %222 : vector<8x1xf32>
    %668 = arith.select %667, %660, %656 : vector<8x1xi1>, vector<8x1xf32>
    %669 = arith.select %667, %657, %660 : vector<8x1xi1>, vector<8x1xf32>
    %c37_i32 = arith.constant 37 : i32
    %670 = arith.addf %668, %669 : vector<8x1xf32>
    %cst_141 = arith.constant 5.000000e-01 : f32
    %671 = vector.broadcast %cst_141 : f32 to vector<8x1xf32>
    %672 = arith.mulf %671, %670 : vector<8x1xf32>
    %673 = vector.broadcast %672 : vector<8x1xf32> to vector<8x128xf32>
    %674 = arith.cmpf ogt, %218, %673 : vector<8x128xf32>
    %675 = arith.extui %674 : vector<8x128xi1> to vector<8x128xi32>
    %676 = arith.sitofp %675 : vector<8x128xi32> to vector<8x128xf32>
    %cst_142 = arith.constant dense<0.000000e+00> : vector<8xf32>
    %677 = vector.multi_reduction <add>, %676, %cst_142 [1] : vector<8x128xf32> to vector<8xf32>
    %678 = vector.shape_cast %677 : vector<8xf32> to vector<8x1xf32>
    %679 = arith.cmpf oge, %678, %222 : vector<8x1xf32>
    %680 = arith.select %679, %672, %668 : vector<8x1xi1>, vector<8x1xf32>
    %681 = arith.select %679, %669, %672 : vector<8x1xi1>, vector<8x1xf32>
    %c38_i32 = arith.constant 38 : i32
    %682 = arith.addf %680, %681 : vector<8x1xf32>
    %cst_143 = arith.constant 5.000000e-01 : f32
    %683 = vector.broadcast %cst_143 : f32 to vector<8x1xf32>
    %684 = arith.mulf %683, %682 : vector<8x1xf32>
    %685 = vector.broadcast %684 : vector<8x1xf32> to vector<8x128xf32>
    %686 = arith.cmpf ogt, %218, %685 : vector<8x128xf32>
    %687 = arith.extui %686 : vector<8x128xi1> to vector<8x128xi32>
    %688 = arith.sitofp %687 : vector<8x128xi32> to vector<8x128xf32>
    %cst_144 = arith.constant dense<0.000000e+00> : vector<8xf32>
    %689 = vector.multi_reduction <add>, %688, %cst_144 [1] : vector<8x128xf32> to vector<8xf32>
    %690 = vector.shape_cast %689 : vector<8xf32> to vector<8x1xf32>
    %691 = arith.cmpf oge, %690, %222 : vector<8x1xf32>
    %692 = arith.select %691, %684, %680 : vector<8x1xi1>, vector<8x1xf32>
    %693 = arith.select %691, %681, %684 : vector<8x1xi1>, vector<8x1xf32>
    %c39_i32 = arith.constant 39 : i32
    %694 = arith.addf %692, %693 : vector<8x1xf32>
    %cst_145 = arith.constant 5.000000e-01 : f32
    %695 = vector.broadcast %cst_145 : f32 to vector<8x1xf32>
    %696 = arith.mulf %695, %694 : vector<8x1xf32>
    %697 = vector.broadcast %696 : vector<8x1xf32> to vector<8x128xf32>
    %698 = arith.cmpf ogt, %218, %697 : vector<8x128xf32>
    %699 = arith.extui %698 : vector<8x128xi1> to vector<8x128xi32>
    %700 = arith.sitofp %699 : vector<8x128xi32> to vector<8x128xf32>
    %cst_146 = arith.constant dense<0.000000e+00> : vector<8xf32>
    %701 = vector.multi_reduction <add>, %700, %cst_146 [1] : vector<8x128xf32> to vector<8xf32>
    %702 = vector.shape_cast %701 : vector<8xf32> to vector<8x1xf32>
    %703 = arith.cmpf oge, %702, %222 : vector<8x1xf32>
    %704 = arith.select %703, %696, %692 : vector<8x1xi1>, vector<8x1xf32>
    %705 = arith.select %703, %693, %696 : vector<8x1xi1>, vector<8x1xf32>
    %706 = vector.broadcast %705 : vector<8x1xf32> to vector<8x128xf32>
    %707 = arith.cmpf ole, %218, %706 : vector<8x128xf32>
    %cst_147 = arith.constant -1.000000e+00 : f32
    %708 = vector.broadcast %cst_147 : f32 to vector<8x128xf32>
    %709 = arith.select %707, %218, %708 : vector<8x128xi1>, vector<8x128xf32>
    %cst_148 = arith.constant dense<0xFF800000> : vector<8xf32>
    %710 = vector.multi_reduction <maximumf>, %709, %cst_148 [1] : vector<8x128xf32> to vector<8xf32>
    %711 = vector.shape_cast %710 : vector<8xf32> to vector<8x1xf32>
    %712 = vector.broadcast %711 : vector<8x1xf32> to vector<8x128xf32>
    %713 = arith.cmpf ogt, %218, %712 : vector<8x128xf32>
    %714 = arith.extui %713 : vector<8x128xi1> to vector<8x128xi32>
    %715 = arith.sitofp %714 : vector<8x128xi32> to vector<8x128xf32>
    %cst_149 = arith.constant dense<0.000000e+00> : vector<8xf32>
    %716 = vector.multi_reduction <add>, %715, %cst_149 [1] : vector<8x128xf32> to vector<8xf32>
    %717 = vector.shape_cast %716 : vector<8xf32> to vector<8x1xf32>
    %cst_150 = arith.constant 0.000000e+00 : f32
    %718 = vector.broadcast %cst_150 : f32 to vector<8x128xf32>
    %719 = arith.select %713, %218, %718 : vector<8x128xi1>, vector<8x128xf32>
    %cst_151 = arith.constant dense<0.000000e+00> : vector<8xf32>
    %720 = vector.multi_reduction <add>, %719, %cst_151 [1] : vector<8x128xf32> to vector<8xf32>
    %721 = vector.shape_cast %720 : vector<8xf32> to vector<8x1xf32>
    %722 = arith.subf %222, %717 : vector<8x1xf32>
    %cst_152 = arith.constant 0.000000e+00 : f32
    %723 = vector.broadcast %cst_152 : f32 to vector<8x1xf32>
    %724 = arith.maximumf %722, %723 : vector<8x1xf32>
    %725 = arith.mulf %724, %711 : vector<8x1xf32>
    %726 = arith.addf %721, %725 : vector<8x1xf32>
    %cst_153 = arith.constant 5.000000e-01 : f32
    %727 = vector.broadcast %cst_153 : f32 to vector<8x1xf32>
    %728 = arith.cmpf oge, %222, %727 : vector<8x1xf32>
    %cst_154 = arith.constant 0.000000e+00 : f32
    %729 = vector.broadcast %cst_154 : f32 to vector<8x1xf32>
    %730 = arith.select %728, %726, %729 : vector<8x1xi1>, vector<8x1xf32>
    %731 = tpu.iota {dimensions = array<i32: 1>} : vector<8x128xi32>
    %c0_i32_155 = arith.constant 0 : i32
    %732 = vector.broadcast %c0_i32_155 : i32 to vector<8x128xi32>
    %733 = arith.cmpi eq, %731, %732 : vector<8x128xi32>
    %cst_156 = arith.constant 0.000000e+00 : f32
    %734 = vector.shape_cast %194 : vector<8x1xf32> to vector<8x1xf32>
    %735 = vector.broadcast %734 : vector<8x1xf32> to vector<8x128xf32>
    %736 = vector.broadcast %cst_156 : f32 to vector<8x128xf32>
    %737 = arith.select %733, %735, %736 : vector<8x128xi1>, vector<8x128xf32>
    %c1_i32_157 = arith.constant 1 : i32
    %738 = vector.broadcast %c1_i32_157 : i32 to vector<8x128xi32>
    %739 = arith.cmpi eq, %731, %738 : vector<8x128xi32>
    %740 = vector.shape_cast %129 : vector<8x1xf32> to vector<8x1xf32>
    %741 = vector.broadcast %740 : vector<8x1xf32> to vector<8x128xf32>
    %742 = arith.select %739, %741, %737 : vector<8x128xi1>, vector<8x128xf32>
    %c2_i32_158 = arith.constant 2 : i32
    %743 = vector.broadcast %c2_i32_158 : i32 to vector<8x128xi32>
    %744 = arith.cmpi eq, %731, %743 : vector<8x128xi32>
    %745 = vector.shape_cast %215 : vector<8x1xf32> to vector<8x1xf32>
    %746 = vector.broadcast %745 : vector<8x1xf32> to vector<8x128xf32>
    %747 = arith.select %744, %746, %742 : vector<8x128xi1>, vector<8x128xf32>
    %c3_i32_159 = arith.constant 3 : i32
    %748 = vector.broadcast %c3_i32_159 : i32 to vector<8x128xi32>
    %749 = arith.cmpi eq, %731, %748 : vector<8x128xi32>
    %750 = vector.shape_cast %730 : vector<8x1xf32> to vector<8x1xf32>
    %751 = vector.broadcast %750 : vector<8x1xf32> to vector<8x128xf32>
    %752 = arith.select %749, %751, %747 : vector<8x128xi1>, vector<8x128xf32>
    %c0_160 = arith.constant 0 : index
    %c0_161 = arith.constant 0 : index
    %c0_162 = arith.constant 0 : index
    %753 = vector.load %arg7[%c0_160, %c0_161, %c0_162] : memref<1x8x128xf32, #tpu.memory_space<vmem>>, vector<1x8x128xf32>
    %754 = vector.shape_cast %753 : vector<1x8x128xf32> to vector<8x128xf32>
    %755 = vector.shape_cast %752 : vector<8x128xf32> to vector<1x8x128xf32>
    tpu.vector_store %arg7[%c0_160, %c0_161, %c0_162], %755 {strides = array<i32>} : memref<1x8x128xf32, #tpu.memory_space<vmem>>, vector<1x8x128xf32>,
    return
  }
  func.func @transform_0(%arg0: i32) -> (i32, i32) {
    %c0_i32 = arith.constant 0 : i32
    %c0_i32_0 = arith.constant 0 : i32
    return %arg0, %c0_i32 : i32, i32
  }
  func.func @transform_1(%arg0: i32) -> (i32, i32) {
    %c0_i32 = arith.constant 0 : i32
    %c0_i32_0 = arith.constant 0 : i32
    %c0_i32_1 = arith.constant 0 : i32
    return %c0_i32, %c0_i32_0 : i32, i32
  }
  func.func @transform_2(%arg0: i32) -> (i32, i32) {
    %c0_i32 = arith.constant 0 : i32
    %c0_i32_0 = arith.constant 0 : i32
    %c0_i32_1 = arith.constant 0 : i32
    return %c0_i32, %c0_i32_0 : i32, i32
  }
  func.func @transform_3(%arg0: i32) -> (i32, i32, i32) {
    %c0_i32 = arith.constant 0 : i32
    %c0_i32_0 = arith.constant 0 : i32
    %c0_i32_1 = arith.constant 0 : i32
    return %c0_i32, %arg0, %c0_i32_0 : i32, i32, i32
  }
  func.func @transform_4(%arg0: i32) -> (i32, i32, i32) {
    %c0_i32 = arith.constant 0 : i32
    %c0_i32_0 = arith.constant 0 : i32
    %c0_i32_1 = arith.constant 0 : i32
    return %c0_i32, %arg0, %c0_i32_0 : i32, i32, i32
  }
  func.func @transform_5(%arg0: i32) -> (i32, i32, i32) {
    %c0_i32 = arith.constant 0 : i32
    %c0_i32_0 = arith.constant 0 : i32
    %c0_i32_1 = arith.constant 0 : i32
    return %c0_i32, %arg0, %c0_i32_0 : i32, i32, i32
  }
  func.func @transform_6(%arg0: i32) -> (i32, i32, i32) {
    %c0_i32 = arith.constant 0 : i32
    %c0_i32_0 = arith.constant 0 : i32
    %c0_i32_1 = arith.constant 0 : i32
    return %arg0, %c0_i32, %c0_i32_0 : i32, i32, i32
  }
}

</mosaic_0001>

<llo_original>
// kernel: tpu_custom_call.1
$region0: #{tpu_custom_call.1}
  #allocation0 [shape = 'u32[]', space=smem, size = 0x4, offset = 0x4, fixed_abs, tag = 'smem constant byte address 0x4 - core index']
  #allocation1 [shape = 'u32[144,128]{1,0:T(1,128)}', space=vmem, size = 0x12000, scoped, tag = 'internal scratch']
  %s0 = inlined_call_operand.vmem [shape: s32[8,1], index: 0, kind: input, shape index: {}]
  %s1 = inlined_call_operand.vmem [shape: f32[4,128], index: 1, kind: input, shape index: {}]
  %s2 = inlined_call_operand.vmem [shape: f32[4,128], index: 2, kind: input, shape index: {}]
  %s3 = inlined_call_operand.hbm [shape: f32[8,8,8], index: 3, kind: input, shape index: {}]
  %s4 = inlined_call_operand.hbm [shape: f32[4,8,128], index: 4, kind: input, shape index: {}]
  %s5 = inlined_call_operand.hbm [shape: f32[8,8,128], index: 5, kind: input, shape index: {}]
  %s6 = inlined_call_operand.hbm [shape: f32[1,8,128], index: 6, kind: output, shape index: {}]
  %s7 = sld [smem:[#allocation0]]
  $region46: #{tpu_custom_call.1} parent=0
    _
  %s9 = ssub.s32 1, %s7
  %s10 = scalar_select 0, %s9, %s7
  $region1: #{tpu_custom_call.1} parent=0
    #allocation2 [shape = 'u8[32768]{0}', space=vmem, size = 0x8000, scoped, tag = 'input window, operand 3, single buffered']
    #allocation3 [shape = 's32[1]{0}', space=sflag, size = 0x4, scoped, tag = 'scoped memory for tpu_custom_call.1']
    #allocation4 [shape = 's32[1]{0}', space=sflag, size = 0x4, scoped, tag = 'scoped memory for tpu_custom_call.1']
    #allocation5 [shape = 'u8[16384]{0}', space=vmem, size = 0x4000, scoped, tag = 'input window, operand 4, single buffered']
    #allocation6 [shape = 's32[1]{0}', space=sflag, size = 0x4, scoped, tag = 'scoped memory for tpu_custom_call.1']
    #allocation7 [shape = 'u8[32768]{0}', space=vmem, size = 0x8000, scoped, tag = 'input window, operand 5, single buffered']
    #allocation8 [shape = 'u8[4096]{0}', space=vmem, size = 0x1000, scoped, tag = 'output window, operand 0, single buffered']
    %11 = vsyncpa [#allocation3], 0
    %12 = vsyncpa [#allocation6], 0
    %13 = vsyncpa [#allocation4], 0
    // Predicated region
    $region2: #{tpu_custom_call.1} parent=1 // pred_check
      _
    $region3: #{tpu_custom_call.1} parent=1 // pred_check_branch
      %15 = sbr.rel (0) target = $region5
    $region4: #{tpu_custom_call.1} parent=1 // pred_region
      _
    $region5: #{tpu_custom_call.1} parent=1 // pred_fallthru
      _
    // Predicated region
    $region6: #{tpu_custom_call.1} parent=1 // pred_check
      _
    $region7: #{tpu_custom_call.1} parent=1 // pred_check_branch
      %17 = sbr.rel (0) target = $region9
    $region8: #{tpu_custom_call.1} parent=1 // pred_region
      _
    $region9: #{tpu_custom_call.1} parent=1 // pred_fallthru
      _
    // Predicated region
    $region10: #{tpu_custom_call.1} parent=1 // pred_check
      _
    $region11: #{tpu_custom_call.1} parent=1 // pred_check_branch
      %19 = sbr.rel (0) target = $region13
    $region12: #{tpu_custom_call.1} parent=1 // pred_region
      _
    $region13: #{tpu_custom_call.1} parent=1 // pred_fallthru
      _
    // Predicated region
    $region14: #{tpu_custom_call.1} parent=1 // pred_check
      _
    $region15: #{tpu_custom_call.1} parent=1 // pred_check_branch
      %21 = sbr.rel (0) target = $region17
    $region16: #{tpu_custom_call.1} parent=1 // pred_region
      %s23 = ssub.s32 1024, 1024
      %24 = vsyncadd [#allocation3], %s23
      %s25 = sshll.u32 [#allocation2], 4
      %s26 = int_to_ptr.vmem [resolvable:$true] %s25
      %31 = dma.hbm_to_vmem [thread:$0]  %s3, 1024, %s26, [#allocation3], 128, 128, 8
    $region17: #{tpu_custom_call.1} parent=1 // pred_fallthru
      _
    // Predicated region
    $region18: #{tpu_custom_call.1} parent=1 // pred_check
      _
    $region19: #{tpu_custom_call.1} parent=1 // pred_check_branch
      %33 = sbr.rel (0) target = $region21
    $region20: #{tpu_custom_call.1} parent=1 // pred_region
      %s35 = ssub.s32 512, 512
      %36 = vsyncadd [#allocation6], %s35
      %s37 = sshll.u32 [#allocation5], 4
      %s38 = int_to_ptr.vmem [resolvable:$true] %s37
      %43 = dma.hbm_to_vmem [thread:$0]  %s4, 512, %s38, [#allocation6], 128, 128, 8
    $region21: #{tpu_custom_call.1} parent=1 // pred_fallthru
      _
    // Predicated region
    $region22: #{tpu_custom_call.1} parent=1 // pred_check
      _
    $region23: #{tpu_custom_call.1} parent=1 // pred_check_branch
      %45 = sbr.rel (0) target = $region25
    $region24: #{tpu_custom_call.1} parent=1 // pred_region
      %s47 = ssub.s32 1024, 1024
      %48 = vsyncadd [#allocation6], %s47
      %s49 = sshll.u32 [#allocation7], 4
      %s50 = int_to_ptr.vmem [resolvable:$true] %s49
      %55 = dma.hbm_to_vmem [thread:$0]  %s5, 1024, %s50, [#allocation6], 128, 128, 8
    $region25: #{tpu_custom_call.1} parent=1 // pred_fallthru
      _
    // Predicated region
    $region26: #{tpu_custom_call.1} parent=1 // pred_check
      _
    $region27: #{tpu_custom_call.1} parent=1 // pred_check_branch
      %57 = sbr.rel (0) target = $region29
    $region28: #{tpu_custom_call.1} parent=1 // pred_region
      %58 = dma.done [#allocation3], 1024
    $region29: #{tpu_custom_call.1} parent=1 // pred_fallthru
      _
    // Predicated region
    $region30: #{tpu_custom_call.1} parent=1 // pred_check
      _
    $region31: #{tpu_custom_call.1} parent=1 // pred_check_branch
      %60 = sbr.rel (0) target = $region33
    $region32: #{tpu_custom_call.1} parent=1 // pred_region
      %61 = dma.done [#allocation6], 512
    $region33: #{tpu_custom_call.1} parent=1 // pred_fallthru
      _
    // Predicated region
    $region34: #{tpu_custom_call.1} parent=1 // pred_check
      _
    $region35: #{tpu_custom_call.1} parent=1 // pred_check_branch
      %63 = sbr.rel (0) target = $region37
    $region36: #{tpu_custom_call.1} parent=1 // pred_region
      %64 = dma.done [#allocation6], 1024
    $region37: #{tpu_custom_call.1} parent=1 // pred_fallthru
      _
    %v65 = vld [vmem:[%s1] sm:$0xf]
    %v66 = vld [vmem:[%s2] sm:$0xf]
    %v67 = vld [vmem:[#allocation2] sm:$0xff]
    %v68 = vld [vmem:[#allocation2 + $0x8] sm:$0xff]
    %v69 = vld [vmem:[#allocation2 + $0x10] sm:$0xff]
    %v70 = vld [vmem:[#allocation2 + $0x18] sm:$0xff]
    %v71 = vld [vmem:[#allocation2 + $0x20] sm:$0xff]
    %v72 = vld [vmem:[#allocation2 + $0x28] sm:$0xff]
    %v73 = vld [vmem:[#allocation2 + $0x30] sm:$0xff]
    %v74 = vld [vmem:[#allocation2 + $0x38] sm:$0xff]
    %v75 = vld [vmem:[#allocation5] sm:$0xff]
    %v76 = vld [vmem:[#allocation5 + $0x8] sm:$0xff]
    %v77 = vld [vmem:[#allocation5 + $0x10] sm:$0xff]
    %v78 = vld [vmem:[#allocation5 + $0x18] sm:$0xff]
    %v79 = vld [vmem:[#allocation7] sm:$0xff]
    %v80 = vld [vmem:[#allocation7 + $0x8] sm:$0xff]
    %v81 = vld [vmem:[#allocation7 + $0x10] sm:$0xff]
    %v82 = vld [vmem:[#allocation7 + $0x18] sm:$0xff]
    %v83 = vld [vmem:[#allocation7 + $0x20] sm:$0xff]
    %v84 = vld [vmem:[#allocation7 + $0x28] sm:$0xff]
    %v85 = vld [vmem:[#allocation7 + $0x30] sm:$0xff]
    %v86 = vld [vmem:[#allocation7 + $0x38] sm:$0xff]
    %v87 = vld [vmem:[%s0] sm:$0xff]
    %v88 = vlaneseq
    %v89 = vshrl.u32 %v88, 7
    %v90 = vsub.s32 2, %v89
    %v91 = vrot.slane %v66, %v90
    %93 = vset.pattern.permute.xlu0 2
    %94 = vperm.xlu0 %93, %v67
    %v95 = vpop.permute.xlu0 %94
    %98 = vset.pattern.permute.xlu0 2
    %99 = vperm.xlu0 %98, %v68
    %v100 = vpop.permute.xlu0 %99
    %103 = vset.pattern.permute.xlu0 2
    %104 = vperm.xlu0 %103, %v69
    %v105 = vpop.permute.xlu0 %104
    %108 = vset.pattern.permute.xlu0 2
    %109 = vperm.xlu0 %108, %v70
    %v110 = vpop.permute.xlu0 %109
    %113 = vset.pattern.permute.xlu0 2
    %114 = vperm.xlu0 %113, %v71
    %v115 = vpop.permute.xlu0 %114
    %118 = vset.pattern.permute.xlu0 2
    %119 = vperm.xlu0 %118, %v72
    %v120 = vpop.permute.xlu0 %119
    %123 = vset.pattern.permute.xlu0 2
    %124 = vperm.xlu0 %123, %v73
    %v125 = vpop.permute.xlu0 %124
    %128 = vset.pattern.permute.xlu0 2
    %129 = vperm.xlu0 %128, %v74
    %v130 = vpop.permute.xlu0 %129
    %v132 = vmin.f32 %v91, %v95
    %v133 = vmin.f32 %v91, %v100
    %v134 = vmin.f32 %v91, %v105
    %v135 = vmin.f32 %v91, %v110
    %v136 = vmin.f32 %v91, %v115
    %v137 = vmin.f32 %v91, %v120
    %v138 = vmin.f32 %v91, %v125
    %v139 = vmin.f32 %v91, %v130
    %v140 = vlaneseq
    %v141 = vshrl.u32 %v140, 7
    %v142 = vsub.s32 0, %v141
    %v143 = vrot.slane %v66, %v142
    %144 = vset.pattern.permute.xlu0 0
    %145 = vperm.xlu0 %144, %v67
    %v146 = vpop.permute.xlu0 %145
    %148 = vset.pattern.permute.xlu0 0
    %149 = vperm.xlu0 %148, %v68
    %v150 = vpop.permute.xlu0 %149
    %152 = vset.pattern.permute.xlu0 0
    %153 = vperm.xlu0 %152, %v69
    %v154 = vpop.permute.xlu0 %153
    %156 = vset.pattern.permute.xlu0 0
    %157 = vperm.xlu0 %156, %v70
    %v158 = vpop.permute.xlu0 %157
    %160 = vset.pattern.permute.xlu0 0
    %161 = vperm.xlu0 %160, %v71
    %v162 = vpop.permute.xlu0 %161
    %164 = vset.pattern.permute.xlu0 0
    %165 = vperm.xlu0 %164, %v72
    %v166 = vpop.permute.xlu0 %165
    %168 = vset.pattern.permute.xlu0 0
    %169 = vperm.xlu0 %168, %v73
    %v170 = vpop.permute.xlu0 %169
    %172 = vset.pattern.permute.xlu0 0
    %173 = vperm.xlu0 %172, %v74
    %v174 = vpop.permute.xlu0 %173
    %v176 = vmax.f32 %v143, %v146
    %v177 = vmax.f32 %v143, %v150
    %v178 = vmax.f32 %v143, %v154
    %v179 = vmax.f32 %v143, %v158
    %v180 = vmax.f32 %v143, %v162
    %v181 = vmax.f32 %v143, %v166
    %v182 = vmax.f32 %v143, %v170
    %v183 = vmax.f32 %v143, %v174
    %v184 = vsub.f32 %v132, %v176
    %v185 = vsub.f32 %v133, %v177
    %v186 = vsub.f32 %v134, %v178
    %v187 = vsub.f32 %v135, %v179
    %v188 = vsub.f32 %v136, %v180
    %v189 = vsub.f32 %v137, %v181
    %v190 = vsub.f32 %v138, %v182
    %v191 = vsub.f32 %v139, %v183
    %v192 = vmax.f32 %v184, 0.0
    %v193 = vmax.f32 %v185, 0.0
    %v194 = vmax.f32 %v186, 0.0
    %v195 = vmax.f32 %v187, 0.0
    %v196 = vmax.f32 %v188, 0.0
    %v197 = vmax.f32 %v189, 0.0
    %v198 = vmax.f32 %v190, 0.0
    %v199 = vmax.f32 %v191, 0.0
    %v200 = vlaneseq
    %v201 = vshrl.u32 %v200, 7
    %v202 = vsub.s32 3, %v201
    %v203 = vrot.slane %v66, %v202
    %204 = vset.pattern.permute.xlu0 3
    %205 = vperm.xlu0 %204, %v67
    %v206 = vpop.permute.xlu0 %205
    %208 = vset.pattern.permute.xlu0 3
    %209 = vperm.xlu0 %208, %v68
    %v210 = vpop.permute.xlu0 %209
    %212 = vset.pattern.permute.xlu0 3
    %213 = vperm.xlu0 %212, %v69
    %v214 = vpop.permute.xlu0 %213
    %216 = vset.pattern.permute.xlu0 3
    %217 = vperm.xlu0 %216, %v70
    %v218 = vpop.permute.xlu0 %217
    %220 = vset.pattern.permute.xlu0 3
    %221 = vperm.xlu0 %220, %v71
    %v222 = vpop.permute.xlu0 %221
    %224 = vset.pattern.permute.xlu0 3
    %225 = vperm.xlu0 %224, %v72
    %v226 = vpop.permute.xlu0 %225
    %228 = vset.pattern.permute.xlu0 3
    %229 = vperm.xlu0 %228, %v73
    %v230 = vpop.permute.xlu0 %229
    %232 = vset.pattern.permute.xlu0 3
    %233 = vperm.xlu0 %232, %v74
    %v234 = vpop.permute.xlu0 %233
    %v236 = vmin.f32 %v203, %v206
    %v237 = vmin.f32 %v203, %v210
    %v238 = vmin.f32 %v203, %v214
    %v239 = vmin.f32 %v203, %v218
    %v240 = vmin.f32 %v203, %v222
    %v241 = vmin.f32 %v203, %v226
    %v242 = vmin.f32 %v203, %v230
    %v243 = vmin.f32 %v203, %v234
    %v244 = vlaneseq
    %v245 = vshrl.u32 %v244, 7
    %v246 = vsub.s32 1, %v245
    %v247 = vrot.slane %v66, %v246
    %248 = vset.pattern.permute.xlu0 1
    %249 = vperm.xlu0 %248, %v67
    %v250 = vpop.permute.xlu0 %249
    %252 = vset.pattern.permute.xlu0 1
    %253 = vperm.xlu0 %252, %v68
    %v254 = vpop.permute.xlu0 %253
    %256 = vset.pattern.permute.xlu0 1
    %257 = vperm.xlu0 %256, %v69
    %v258 = vpop.permute.xlu0 %257
    %260 = vset.pattern.permute.xlu0 1
    %261 = vperm.xlu0 %260, %v70
    %v262 = vpop.permute.xlu0 %261
    %264 = vset.pattern.permute.xlu0 1
    %265 = vperm.xlu0 %264, %v71
    %v266 = vpop.permute.xlu0 %265
    %268 = vset.pattern.permute.xlu0 1
    %269 = vperm.xlu0 %268, %v72
    %v270 = vpop.permute.xlu0 %269
    %272 = vset.pattern.permute.xlu0 1
    %273 = vperm.xlu0 %272, %v73
    %v274 = vpop.permute.xlu0 %273
    %276 = vset.pattern.permute.xlu0 1
    %277 = vperm.xlu0 %276, %v74
    %v278 = vpop.permute.xlu0 %277
    %v280 = vmax.f32 %v247, %v250
    %v281 = vmax.f32 %v247, %v254
    %v282 = vmax.f32 %v247, %v258
    %v283 = vmax.f32 %v247, %v262
    %v284 = vmax.f32 %v247, %v266
    %v285 = vmax.f32 %v247, %v270
    %v286 = vmax.f32 %v247, %v274
    %v287 = vmax.f32 %v247, %v278
    %v288 = vsub.f32 %v236, %v280
    %v289 = vsub.f32 %v237, %v281
    %v290 = vsub.f32 %v238, %v282
    %v291 = vsub.f32 %v239, %v283
    %v292 = vsub.f32 %v240, %v284
    %v293 = vsub.f32 %v241, %v285
    %v294 = vsub.f32 %v242, %v286
    %v295 = vsub.f32 %v243, %v287
    %v296 = vmax.f32 %v288, 0.0
    %v297 = vmax.f32 %v289, 0.0
    %v298 = vmax.f32 %v290, 0.0
    %v299 = vmax.f32 %v291, 0.0
    %v300 = vmax.f32 %v292, 0.0
    %v301 = vmax.f32 %v293, 0.0
    %v302 = vmax.f32 %v294, 0.0
    %v303 = vmax.f32 %v295, 0.0
    %v304 = vmul.f32 %v192, %v296
    %v305 = vmul.f32 %v193, %v297
    %v306 = vmul.f32 %v194, %v298
    %v307 = vmul.f32 %v195, %v299
    %v308 = vmul.f32 %v196, %v300
    %v309 = vmul.f32 %v197, %v301
    %v310 = vmul.f32 %v198, %v302
    %v311 = vmul.f32 %v199, %v303
    %v313 = vrot.slane %v66, 6
    %v315 = vsub.f32 %v66, %v313
    %v317 = vrot.slane %v315, 1
    %v319 = vmul.f32 %v315, %v317
    %320 = vrot.lane.b32.xlu0 %v67, 2
    %v321 = vpop.permute.xlu0 %320
    %322 = vrot.lane.b32.xlu0 %v68, 2
    %v323 = vpop.permute.xlu0 %322
    %324 = vrot.lane.b32.xlu0 %v69, 2
    %v325 = vpop.permute.xlu0 %324
    %326 = vrot.lane.b32.xlu0 %v70, 2
    %v327 = vpop.permute.xlu0 %326
    %328 = vrot.lane.b32.xlu0 %v71, 2
    %v329 = vpop.permute.xlu0 %328
    %330 = vrot.lane.b32.xlu0 %v72, 2
    %v331 = vpop.permute.xlu0 %330
    %332 = vrot.lane.b32.xlu0 %v73, 2
    %v333 = vpop.permute.xlu0 %332
    %334 = vrot.lane.b32.xlu0 %v74, 2
    %v335 = vpop.permute.xlu0 %334
    %v344 = vsub.f32 %v67, %v321
    %v345 = vsub.f32 %v68, %v323
    %v346 = vsub.f32 %v69, %v325
    %v347 = vsub.f32 %v70, %v327
    %v348 = vsub.f32 %v71, %v329
    %v349 = vsub.f32 %v72, %v331
    %v350 = vsub.f32 %v73, %v333
    %v351 = vsub.f32 %v74, %v335
    %360 = vrot.lane.b32.xlu0 %v344, 127
    %v361 = vpop.permute.xlu0 %360
    %362 = vrot.lane.b32.xlu0 %v345, 127
    %v363 = vpop.permute.xlu0 %362
    %364 = vrot.lane.b32.xlu0 %v346, 127
    %v365 = vpop.permute.xlu0 %364
    %366 = vrot.lane.b32.xlu0 %v347, 127
    %v367 = vpop.permute.xlu0 %366
    %368 = vrot.lane.b32.xlu0 %v348, 127
    %v369 = vpop.permute.xlu0 %368
    %370 = vrot.lane.b32.xlu0 %v349, 127
    %v371 = vpop.permute.xlu0 %370
    %372 = vrot.lane.b32.xlu0 %v350, 127
    %v373 = vpop.permute.xlu0 %372
    %374 = vrot.lane.b32.xlu0 %v351, 127
    %v375 = vpop.permute.xlu0 %374
    %v384 = vmul.f32 %v344, %v361
    %v385 = vmul.f32 %v345, %v363
    %v386 = vmul.f32 %v346, %v365
    %v387 = vmul.f32 %v347, %v367
    %v388 = vmul.f32 %v348, %v369
    %v389 = vmul.f32 %v349, %v371
    %v390 = vmul.f32 %v350, %v373
    %v391 = vmul.f32 %v351, %v375
    %v392 = vlaneseq
    %v393 = vshrl.u32 %v392, 7
    %v394 = vsub.s32 2, %v393
    %v395 = vrot.slane %v319, %v394
    %397 = vset.pattern.permute.xlu0 2
    %398 = vperm.xlu0 %397, %v384
    %v399 = vpop.permute.xlu0 %398
    %402 = vset.pattern.permute.xlu0 2
    %403 = vperm.xlu0 %402, %v385
    %v404 = vpop.permute.xlu0 %403
    %407 = vset.pattern.permute.xlu0 2
    %408 = vperm.xlu0 %407, %v386
    %v409 = vpop.permute.xlu0 %408
    %412 = vset.pattern.permute.xlu0 2
    %413 = vperm.xlu0 %412, %v387
    %v414 = vpop.permute.xlu0 %413
    %417 = vset.pattern.permute.xlu0 2
    %418 = vperm.xlu0 %417, %v388
    %v419 = vpop.permute.xlu0 %418
    %422 = vset.pattern.permute.xlu0 2
    %423 = vperm.xlu0 %422, %v389
    %v424 = vpop.permute.xlu0 %423
    %427 = vset.pattern.permute.xlu0 2
    %428 = vperm.xlu0 %427, %v390
    %v429 = vpop.permute.xlu0 %428
    %432 = vset.pattern.permute.xlu0 2
    %433 = vperm.xlu0 %432, %v391
    %v434 = vpop.permute.xlu0 %433
    %v436 = vadd.f32 %v395, %v399
    %v437 = vadd.f32 %v395, %v404
    %v438 = vadd.f32 %v395, %v409
    %v439 = vadd.f32 %v395, %v414
    %v440 = vadd.f32 %v395, %v419
    %v441 = vadd.f32 %v395, %v424
    %v442 = vadd.f32 %v395, %v429
    %v443 = vadd.f32 %v395, %v434
    %v444 = vsub.f32 %v436, %v304
    %v445 = vsub.f32 %v437, %v305
    %v446 = vsub.f32 %v438, %v306
    %v447 = vsub.f32 %v439, %v307
    %v448 = vsub.f32 %v440, %v308
    %v449 = vsub.f32 %v441, %v309
    %v450 = vsub.f32 %v442, %v310
    %v451 = vsub.f32 %v443, %v311
    %v452 = vmax.f32 %v444, 1e-10
    %v453 = vmax.f32 %v445, 1e-10
    %v454 = vmax.f32 %v446, 1e-10
    %v455 = vmax.f32 %v447, 1e-10
    %v456 = vmax.f32 %v448, 1e-10
    %v457 = vmax.f32 %v449, 1e-10
    %v458 = vmax.f32 %v450, 1e-10
    %v459 = vmax.f32 %v451, 1e-10
    %v460 = vrcp.pop %v452
    %v461 = vmul.f32 %v304, %v460
    %v462 = vrcp.pop %v453
    %v463 = vmul.f32 %v305, %v462
    %v464 = vrcp.pop %v454
    %v465 = vmul.f32 %v306, %v464
    %v466 = vrcp.pop %v455
    %v467 = vmul.f32 %v307, %v466
    %v468 = vrcp.pop %v456
    %v469 = vmul.f32 %v308, %v468
    %v470 = vrcp.pop %v457
    %v471 = vmul.f32 %v309, %v470
    %v472 = vrcp.pop %v458
    %v473 = vmul.f32 %v310, %v472
    %v474 = vrcp.pop %v459
    %v475 = vmul.f32 %v311, %v474
    %v476 = vlaneseq
    %v477 = vand.u32 %v476, 127
    %478 = vset.pattern.permute.xlu0 0
    %479 = vperm.xlu0 %478, %v87
    %v480 = vpop.permute.xlu0 %479
    %vm481 = vcmp.gt.s32.totalorder %v480, 0
    %vm482 = vcmp.gt.s32.totalorder %v480, 1
    %vm483 = vcmp.gt.s32.totalorder %v480, 2
    %vm484 = vcmp.gt.s32.totalorder %v480, 3
    %vm485 = vcmp.gt.s32.totalorder %v480, 4
    %vm486 = vcmp.gt.s32.totalorder %v480, 5
    %vm487 = vcmp.gt.s32.totalorder %v480, 6
    %vm488 = vcmp.gt.s32.totalorder %v480, 7
    %v489 = vsel %vm481, %v461, -1.0
    %v490 = vsel %vm482, %v463, -1.0
    %v491 = vsel %vm483, %v465, -1.0
    %v492 = vsel %vm484, %v467, -1.0
    %v493 = vsel %vm485, %v469, -1.0
    %v494 = vsel %vm486, %v471, -1.0
    %v495 = vsel %vm487, %v473, -1.0
    %v496 = vsel %vm488, %v475, -1.0
    %v497 = vmax.f32 %v489, %v493
    %v498 = vmax.f32 %v490, %v494
    %v499 = vmax.f32 %v491, %v495
    %v500 = vmax.f32 %v492, %v496
    %v501 = vmax.f32 %v497, %v498
    %v502 = vmax.f32 %v499, %v500
    %v503 = vmax.f32 %v501, %v502
    %vm504 = vcmp.eq.f32.partialorder %v489, %v503
    %vm505 = vcmp.eq.f32.partialorder %v490, %v503
    %vm506 = vcmp.eq.f32.partialorder %v491, %v503
    %vm507 = vcmp.eq.f32.partialorder %v492, %v503
    %vm508 = vcmp.eq.f32.partialorder %v493, %v503
    %vm509 = vcmp.eq.f32.partialorder %v494, %v503
    %vm510 = vcmp.eq.f32.partialorder %v495, %v503
    %vm511 = vcmp.eq.f32.partialorder %v496, %v503
    %v512 = vsel %vm504, 0, 8
    %v513 = vsel %vm505, 1, 8
    %v514 = vsel %vm506, 2, 8
    %v515 = vsel %vm507, 3, 8
    %v516 = vsel %vm508, 4, 8
    %v517 = vsel %vm509, 5, 8
    %v518 = vsel %vm510, 6, 8
    %v519 = vsel %vm511, 7, 8
    %vm520 = vcmp.lt.s32.totalorder %v512, %v516
    %v521 = vsel %vm520, %v512, %v516
    %vm522 = vcmp.lt.s32.totalorder %v513, %v517
    %v523 = vsel %vm522, %v513, %v517
    %vm524 = vcmp.lt.s32.totalorder %v514, %v518
    %v525 = vsel %vm524, %v514, %v518
    %vm526 = vcmp.lt.s32.totalorder %v515, %v519
    %v527 = vsel %vm526, %v515, %v519
    %vm528 = vcmp.lt.s32.totalorder %v521, %v523
    %v529 = vsel %vm528, %v521, %v523
    %vm530 = vcmp.lt.s32.totalorder %v525, %v527
    %v531 = vsel %vm530, %v525, %v527
    %vm532 = vcmp.lt.s32.totalorder %v529, %v531
    %v533 = vsel %vm532, %v529, %v531
    %534 = vmax.xlane.f32.xlu0 %v489
    %v535 = vpop.xlane.xlu0 %534
    %536 = vmax.xlane.f32.xlu0 %v490
    %v537 = vpop.xlane.xlu0 %536
    %538 = vmax.xlane.f32.xlu0 %v491
    %v539 = vpop.xlane.xlu0 %538
    %540 = vmax.xlane.f32.xlu0 %v492
    %v541 = vpop.xlane.xlu0 %540
    %542 = vmax.xlane.f32.xlu0 %v493
    %v543 = vpop.xlane.xlu0 %542
    %544 = vmax.xlane.f32.xlu0 %v494
    %v545 = vpop.xlane.xlu0 %544
    %546 = vmax.xlane.f32.xlu0 %v495
    %v547 = vpop.xlane.xlu0 %546
    %548 = vmax.xlane.f32.xlu0 %v496
    %v549 = vpop.xlane.xlu0 %548
    %vm550 = vcmp.eq.f32.partialorder %v489, %v535
    %vm551 = vcmp.eq.f32.partialorder %v490, %v537
    %vm552 = vcmp.eq.f32.partialorder %v491, %v539
    %vm553 = vcmp.eq.f32.partialorder %v492, %v541
    %vm554 = vcmp.eq.f32.partialorder %v493, %v543
    %vm555 = vcmp.eq.f32.partialorder %v494, %v545
    %vm556 = vcmp.eq.f32.partialorder %v495, %v547
    %vm557 = vcmp.eq.f32.partialorder %v496, %v549
    %v558 = vsel %vm550, %v477, 128
    %v559 = vsel %vm551, %v477, 128
    %v560 = vsel %vm552, %v477, 128
    %v561 = vsel %vm553, %v477, 128
    %v562 = vsel %vm554, %v477, 128
    %v563 = vsel %vm555, %v477, 128
    %v564 = vsel %vm556, %v477, 128
    %v565 = vsel %vm557, %v477, 128
    %v566 = vand.u32 %v558, 65535
    %v567 = vshra.s32 %v558, 16
    %v568 = vcvt.s32.f32 %v566
    %v569 = vcvt.s32.f32 %v567
    %570 = vmin.xlane.f32.xlu0 %v569
    %v571 = vpop.xlane.xlu0 %570
    %vm572 = vcmp.eq.f32.partialorder %v569, %v571
    %v573 = vsel %vm572, %v568, inf
    %574 = vmin.xlane.f32.xlu0 %v573
    %v575 = vpop.xlane.xlu0 %574
    %v576 = vcvt.f32.s32 %v575
    %v577 = vcvt.f32.s32 %v571
    %v578 = vshll.u32 %v577, 16
    %v579 = vadd.s32 %v578, %v576
    %v580 = vand.u32 %v559, 65535
    %v581 = vshra.s32 %v559, 16
    %v582 = vcvt.s32.f32 %v580
    %v583 = vcvt.s32.f32 %v581
    %584 = vmin.xlane.f32.xlu0 %v583
    %v585 = vpop.xlane.xlu0 %584
    %vm586 = vcmp.eq.f32.partialorder %v583, %v585
    %v587 = vsel %vm586, %v582, inf
    %588 = vmin.xlane.f32.xlu0 %v587
    %v589 = vpop.xlane.xlu0 %588
    %v590 = vcvt.f32.s32 %v589
    %v591 = vcvt.f32.s32 %v585
    %v592 = vshll.u32 %v591, 16
    %v593 = vadd.s32 %v592, %v590
    %v594 = vand.u32 %v560, 65535
    %v595 = vshra.s32 %v560, 16
    %v596 = vcvt.s32.f32 %v594
    %v597 = vcvt.s32.f32 %v595
    %598 = vmin.xlane.f32.xlu0 %v597
    %v599 = vpop.xlane.xlu0 %598
    %vm600 = vcmp.eq.f32.partialorder %v597, %v599
    %v601 = vsel %vm600, %v596, inf
    %602 = vmin.xlane.f32.xlu0 %v601
    %v603 = vpop.xlane.xlu0 %602
    %v604 = vcvt.f32.s32 %v603
    %v605 = vcvt.f32.s32 %v599
    %v606 = vshll.u32 %v605, 16
    %v607 = vadd.s32 %v606, %v604
    %v608 = vand.u32 %v561, 65535
    %v609 = vshra.s32 %v561, 16
    %v610 = vcvt.s32.f32 %v608
    %v611 = vcvt.s32.f32 %v609
    %612 = vmin.xlane.f32.xlu0 %v611
    %v613 = vpop.xlane.xlu0 %612
    %vm614 = vcmp.eq.f32.partialorder %v611, %v613
    %v615 = vsel %vm614, %v610, inf
    %616 = vmin.xlane.f32.xlu0 %v615
    %v617 = vpop.xlane.xlu0 %616
    %v618 = vcvt.f32.s32 %v617
    %v619 = vcvt.f32.s32 %v613
    %v620 = vshll.u32 %v619, 16
    %v621 = vadd.s32 %v620, %v618
    %v622 = vand.u32 %v562, 65535
    %v623 = vshra.s32 %v562, 16
    %v624 = vcvt.s32.f32 %v622
    %v625 = vcvt.s32.f32 %v623
    %626 = vmin.xlane.f32.xlu0 %v625
    %v627 = vpop.xlane.xlu0 %626
    %vm628 = vcmp.eq.f32.partialorder %v625, %v627
    %v629 = vsel %vm628, %v624, inf
    %630 = vmin.xlane.f32.xlu0 %v629
    %v631 = vpop.xlane.xlu0 %630
    %v632 = vcvt.f32.s32 %v631
    %v633 = vcvt.f32.s32 %v627
    %v634 = vshll.u32 %v633, 16
    %v635 = vadd.s32 %v634, %v632
    %v636 = vand.u32 %v563, 65535
    %v637 = vshra.s32 %v563, 16
    %v638 = vcvt.s32.f32 %v636
    %v639 = vcvt.s32.f32 %v637
    %640 = vmin.xlane.f32.xlu0 %v639
    %v641 = vpop.xlane.xlu0 %640
    %vm642 = vcmp.eq.f32.partialorder %v639, %v641
    %v643 = vsel %vm642, %v638, inf
    %644 = vmin.xlane.f32.xlu0 %v643
    %v645 = vpop.xlane.xlu0 %644
    %v646 = vcvt.f32.s32 %v645
    %v647 = vcvt.f32.s32 %v641
    %v648 = vshll.u32 %v647, 16
    %v649 = vadd.s32 %v648, %v646
    %v650 = vand.u32 %v564, 65535
    %v651 = vshra.s32 %v564, 16
    %v652 = vcvt.s32.f32 %v650
    %v653 = vcvt.s32.f32 %v651
    %654 = vmin.xlane.f32.xlu0 %v653
    %v655 = vpop.xlane.xlu0 %654
    %vm656 = vcmp.eq.f32.partialorder %v653, %v655
    %v657 = vsel %vm656, %v652, inf
    %658 = vmin.xlane.f32.xlu0 %v657
    %v659 = vpop.xlane.xlu0 %658
    %v660 = vcvt.f32.s32 %v659
    %v661 = vcvt.f32.s32 %v655
    %v662 = vshll.u32 %v661, 16
    %v663 = vadd.s32 %v662, %v660
    %v664 = vand.u32 %v565, 65535
    %v665 = vshra.s32 %v565, 16
    %v666 = vcvt.s32.f32 %v664
    %v667 = vcvt.s32.f32 %v665
    %668 = vmin.xlane.f32.xlu0 %v667
    %v669 = vpop.xlane.xlu0 %668
    %vm670 = vcmp.eq.f32.partialorder %v667, %v669
    %v671 = vsel %vm670, %v666, inf
    %672 = vmin.xlane.f32.xlu0 %v671
    %v673 = vpop.xlane.xlu0 %672
    %v674 = vcvt.f32.s32 %v673
    %v675 = vcvt.f32.s32 %v669
    %v676 = vshll.u32 %v675, 16
    %v677 = vadd.s32 %v676, %v674
    %vm678 = vcmp.eq.s32.totalorder %v477, %v579
    %vm679 = vcmp.eq.s32.totalorder %v477, %v593
    %vm680 = vcmp.eq.s32.totalorder %v477, %v607
    %vm681 = vcmp.eq.s32.totalorder %v477, %v621
    %vm682 = vcmp.eq.s32.totalorder %v477, %v635
    %vm683 = vcmp.eq.s32.totalorder %v477, %v649
    %vm684 = vcmp.eq.s32.totalorder %v477, %v663
    %vm685 = vcmp.eq.s32.totalorder %v477, %v677
    %vm686 = vmand %vm678, %vm481
    %vm687 = vmand %vm679, %vm482
    %vm688 = vmand %vm680, %vm483
    %vm689 = vmand %vm681, %vm484
    %vm690 = vmand %vm682, %vm485
    %vm691 = vmand %vm683, %vm486
    %vm692 = vmand %vm684, %vm487
    %vm693 = vmand %vm685, %vm488
    %v694 = vsel %vm686, 0, 4294967295
    %v695 = vsel %vm687, 1, 4294967295
    %v696 = vsel %vm688, 2, 4294967295
    %v697 = vsel %vm689, 3, 4294967295
    %v698 = vsel %vm690, 4, 4294967295
    %v699 = vsel %vm691, 5, 4294967295
    %v700 = vsel %vm692, 6, 4294967295
    %v701 = vsel %vm693, 7, 4294967295
    %vm702 = vcmp.gt.s32.totalorder %v694, %v698
    %v703 = vsel %vm702, %v694, %v698
    %vm704 = vcmp.gt.s32.totalorder %v695, %v699
    %v705 = vsel %vm704, %v695, %v699
    %vm706 = vcmp.gt.s32.totalorder %v696, %v700
    %v707 = vsel %vm706, %v696, %v700
    %vm708 = vcmp.gt.s32.totalorder %v697, %v701
    %v709 = vsel %vm708, %v697, %v701
    %vm710 = vcmp.gt.s32.totalorder %v703, %v705
    %v711 = vsel %vm710, %v703, %v705
    %vm712 = vcmp.gt.s32.totalorder %v707, %v709
    %v713 = vsel %vm712, %v707, %v709
    %vm714 = vcmp.gt.s32.totalorder %v711, %v713
    %v715 = vsel %vm714, %v711, %v713
    %vm716 = vcmp.ge.s32.totalorder %v715, 0
    %v717 = vsel %vm716, %v715, %v533
    %vm718 = vcmp.eq.s32.totalorder %v717, 0
    %vm719 = vcmp.eq.s32.totalorder %v717, 1
    %vm720 = vcmp.eq.s32.totalorder %v717, 2
    %vm721 = vcmp.eq.s32.totalorder %v717, 3
    %vm722 = vcmp.eq.s32.totalorder %v717, 4
    %vm723 = vcmp.eq.s32.totalorder %v717, 5
    %vm724 = vcmp.eq.s32.totalorder %v717, 6
    %vm725 = vcmp.eq.s32.totalorder %v717, 7
    %726 = vset.pattern.permute.xlu0 4
    %727 = vperm.xlu0 %726, %v67
    %v728 = vpop.permute.xlu0 %727
    %730 = vset.pattern.permute.xlu0 4
    %731 = vperm.xlu0 %730, %v68
    %v732 = vpop.permute.xlu0 %731
    %734 = vset.pattern.permute.xlu0 4
    %735 = vperm.xlu0 %734, %v69
    %v736 = vpop.permute.xlu0 %735
    %738 = vset.pattern.permute.xlu0 4
    %739 = vperm.xlu0 %738, %v70
    %v740 = vpop.permute.xlu0 %739
    %742 = vset.pattern.permute.xlu0 4
    %743 = vperm.xlu0 %742, %v71
    %v744 = vpop.permute.xlu0 %743
    %746 = vset.pattern.permute.xlu0 4
    %747 = vperm.xlu0 %746, %v72
    %v748 = vpop.permute.xlu0 %747
    %750 = vset.pattern.permute.xlu0 4
    %751 = vperm.xlu0 %750, %v73
    %v752 = vpop.permute.xlu0 %751
    %754 = vset.pattern.permute.xlu0 4
    %755 = vperm.xlu0 %754, %v74
    %v756 = vpop.permute.xlu0 %755
    %v758 = vsel %vm718, %v728, 0.0
    %v759 = vsel %vm719, %v732, 0.0
    %v760 = vsel %vm720, %v736, 0.0
    %v761 = vsel %vm721, %v740, 0.0
    %v762 = vsel %vm722, %v744, 0.0
    %v763 = vsel %vm723, %v748, 0.0
    %v764 = vsel %vm724, %v752, 0.0
    %v765 = vsel %vm725, %v756, 0.0
    %v766 = vadd.f32 %v758, %v759
    %v767 = vadd.f32 %v766, %v760
    %v768 = vadd.f32 %v767, %v761
    %v769 = vadd.f32 %v768, %v762
    %v770 = vadd.f32 %v769, %v763
    %v771 = vadd.f32 %v770, %v764
    %v772 = vadd.f32 %v771, %v765
    %v773 = vsel %vm718, %v146, 0.0
    %v774 = vsel %vm719, %v150, 0.0
    %v775 = vsel %vm720, %v154, 0.0
    %v776 = vsel %vm721, %v158, 0.0
    %v777 = vsel %vm722, %v162, 0.0
    %v778 = vsel %vm723, %v166, 0.0
    %v779 = vsel %vm724, %v170, 0.0
    %v780 = vsel %vm725, %v174, 0.0
    %v781 = vadd.f32 %v773, %v774
    %v782 = vadd.f32 %v781, %v775
    %v783 = vadd.f32 %v782, %v776
    %v784 = vadd.f32 %v783, %v777
    %v785 = vadd.f32 %v784, %v778
    %v786 = vadd.f32 %v785, %v779
    %v787 = vadd.f32 %v786, %v780
    %v788 = vsel %vm718, %v250, 0.0
    %v789 = vsel %vm719, %v254, 0.0
    %v790 = vsel %vm720, %v258, 0.0
    %v791 = vsel %vm721, %v262, 0.0
    %v792 = vsel %vm722, %v266, 0.0
    %v793 = vsel %vm723, %v270, 0.0
    %v794 = vsel %vm724, %v274, 0.0
    %v795 = vsel %vm725, %v278, 0.0
    %v796 = vadd.f32 %v788, %v789
    %v797 = vadd.f32 %v796, %v790
    %v798 = vadd.f32 %v797, %v791
    %v799 = vadd.f32 %v798, %v792
    %v800 = vadd.f32 %v799, %v793
    %v801 = vadd.f32 %v800, %v794
    %v802 = vadd.f32 %v801, %v795
    %v803 = vsel %vm718, %v95, 0.0
    %v804 = vsel %vm719, %v100, 0.0
    %v805 = vsel %vm720, %v105, 0.0
    %v806 = vsel %vm721, %v110, 0.0
    %v807 = vsel %vm722, %v115, 0.0
    %v808 = vsel %vm723, %v120, 0.0
    %v809 = vsel %vm724, %v125, 0.0
    %v810 = vsel %vm725, %v130, 0.0
    %v811 = vadd.f32 %v803, %v804
    %v812 = vadd.f32 %v811, %v805
    %v813 = vadd.f32 %v812, %v806
    %v814 = vadd.f32 %v813, %v807
    %v815 = vadd.f32 %v814, %v808
    %v816 = vadd.f32 %v815, %v809
    %v817 = vadd.f32 %v816, %v810
    %v818 = vsel %vm718, %v206, 0.0
    %v819 = vsel %vm719, %v210, 0.0
    %v820 = vsel %vm720, %v214, 0.0
    %v821 = vsel %vm721, %v218, 0.0
    %v822 = vsel %vm722, %v222, 0.0
    %v823 = vsel %vm723, %v226, 0.0
    %v824 = vsel %vm724, %v230, 0.0
    %v825 = vsel %vm725, %v234, 0.0
    %v826 = vadd.f32 %v818, %v819
    %v827 = vadd.f32 %v826, %v820
    %v828 = vadd.f32 %v827, %v821
    %v829 = vadd.f32 %v828, %v822
    %v830 = vadd.f32 %v829, %v823
    %v831 = vadd.f32 %v830, %v824
    %v832 = vadd.f32 %v831, %v825
    %v833 = vsel %vm686, 1.0, 0.0
    %v834 = vsel %vm687, 1.0, 0.0
    %v835 = vsel %vm688, 1.0, 0.0
    %v836 = vsel %vm689, 1.0, 0.0
    %v837 = vsel %vm690, 1.0, 0.0
    %v838 = vsel %vm691, 1.0, 0.0
    %v839 = vsel %vm692, 1.0, 0.0
    %v840 = vsel %vm693, 1.0, 0.0
    %v841 = vmax.f32 %v833, %v837
    %v842 = vmax.f32 %v834, %v838
    %v843 = vmax.f32 %v835, %v839
    %v844 = vmax.f32 %v836, %v840
    %v845 = vmax.f32 %v841, %v842
    %v846 = vmax.f32 %v843, %v844
    %v847 = vmax.f32 %v845, %v846
    %vm848 = vcmp.gt.f32.partialorder %v847, 0.5
    %vm849 = vcmp.ge.f32.partialorder %v503, 0.5
    %vm850 = vmor %vm848, %vm849
    %v851 = vsel %vm850, %v772, 0.0
    %vm852 = vcmp.ne.f32.partialorder %v851, 0.0
    %v853 = vsel %vm852, 1, 0
    %v854 = vcvt.s32.f32 %v853
    %855 = vadd.xlane.f32.xlu0 %v854
    %v856 = vpop.xlane.xlu0 %855
    %v857 = vmax.f32 %v65, 1e-10
    %v858 = vadd.f32 %v787, %v817
    %v859 = vmul.f32 %v858, 0.5
    %v860 = vadd.f32 %v802, %v832
    %v861 = vmul.f32 %v860, 0.5
    %v862 = vsub.f32 %v817, %v787
    %v863 = vmax.f32 %v862, 1e-10
    %v864 = vsub.f32 %v832, %v802
    %v865 = vmax.f32 %v864, 1e-10
    %v866 = vlaneseq
    %v867 = vshrl.u32 %v866, 7
    %v868 = vsub.s32 0, %v867
    %v869 = vrot.slane %v65, %v868
    %v870 = vsub.f32 %v859, %v869
    %v871 = vmul.f32 %v870, 10.0
    %v872 = vlaneseq
    %v873 = vshrl.u32 %v872, 7
    %v874 = vsub.s32 2, %v873
    %v875 = vrot.slane %v857, %v874
    %v876 = vrcp.pop %v875
    %v877 = vmul.f32 %v871, %v876
    %v878 = vlaneseq
    %v879 = vshrl.u32 %v878, 7
    %v880 = vsub.s32 1, %v879
    %v881 = vrot.slane %v65, %v880
    %v882 = vsub.f32 %v861, %v881
    %v883 = vmul.f32 %v882, 10.0
    %v884 = vlaneseq
    %v885 = vshrl.u32 %v884, 7
    %v886 = vsub.s32 3, %v885
    %v887 = vrot.slane %v857, %v886
    %v888 = vrcp.pop %v887
    %v889 = vmul.f32 %v883, %v888
    %v890 = vmul.f32 %v863, %v876
    %v891 = vlog2.pop %v890
    %v892 = vmul.f32 %v891, 0.6931472
    %v893 = vmul.f32 %v892, 5.0
    %v894 = vmul.f32 %v865, %v888
    %v895 = vlog2.pop %v894
    %v896 = vmul.f32 %v895, 0.6931472
    %v897 = vmul.f32 %v896, 5.0
    %v898 = vsub.f32 %v75, %v877
    %v899 = vand.u32 2147483647, %v898
    %v900 = vsub.f32 %v76, %v889
    %v901 = vand.u32 2147483647, %v900
    %v902 = vadd.f32 %v899, %v901
    %v903 = vsub.f32 %v77, %v893
    %v904 = vand.u32 2147483647, %v903
    %v905 = vadd.f32 %v902, %v904
    %v906 = vsub.f32 %v78, %v897
    %v907 = vand.u32 2147483647, %v906
    %v908 = vadd.f32 %v905, %v907
    %v909 = vsel %vm852, %v908, 0.0
    %910 = vadd.xlane.f32.xlu0 %v909
    %v911 = vpop.xlane.xlu0 %910
    %v912 = vmax.f32 %v79, %v83
    %v913 = vmax.f32 %v80, %v84
    %v914 = vmax.f32 %v81, %v85
    %v915 = vmax.f32 %v82, %v86
    %v916 = vmax.f32 %v912, %v913
    %v917 = vmax.f32 %v914, %v915
    %v918 = vmax.f32 %v916, %v917
    %v919 = vsub.f32 %v79, %v918
    %v920 = vsub.f32 %v80, %v918
    %v921 = vsub.f32 %v81, %v918
    %v922 = vsub.f32 %v82, %v918
    %v923 = vsub.f32 %v83, %v918
    %v924 = vsub.f32 %v84, %v918
    %v925 = vsub.f32 %v85, %v918
    %v926 = vsub.f32 %v86, %v918
    %v927 = vmul.f32 %v919, 1.442695
    %v928 = vpow.pop %v927
    %v929 = vmul.f32 %v920, 1.442695
    %v930 = vpow.pop %v929
    %v931 = vmul.f32 %v921, 1.442695
    %v932 = vpow.pop %v931
    %v933 = vmul.f32 %v922, 1.442695
    %v934 = vpow.pop %v933
    %v935 = vmul.f32 %v923, 1.442695
    %v936 = vpow.pop %v935
    %v937 = vmul.f32 %v924, 1.442695
    %v938 = vpow.pop %v937
    %v939 = vmul.f32 %v925, 1.442695
    %v940 = vpow.pop %v939
    %v941 = vmul.f32 %v926, 1.442695
    %v942 = vpow.pop %v941
    %v943 = vadd.f32 %v928, %v930
    %v944 = vadd.f32 %v943, %v932
    %v945 = vadd.f32 %v944, %v934
    %v946 = vadd.f32 %v945, %v936
    %v947 = vadd.f32 %v946, %v938
    %v948 = vadd.f32 %v947, %v940
    %v949 = vadd.f32 %v948, %v942
    %v950 = vlog2.pop %v949
    %v951 = vmul.f32 %v950, 0.6931472
    %v952 = vadd.f32 %v951, %v918
    %v953 = vcvt.s32.f32 0
    %v954 = vcvt.s32.f32 1
    %v955 = vcvt.s32.f32 2
    %v956 = vcvt.s32.f32 3
    %v957 = vcvt.s32.f32 4
    %v958 = vcvt.s32.f32 5
    %v959 = vcvt.s32.f32 6
    %v960 = vcvt.s32.f32 7
    %vm961 = vcmp.eq.f32.partialorder %v953, %v851
    %vm962 = vcmp.eq.f32.partialorder %v954, %v851
    %vm963 = vcmp.eq.f32.partialorder %v955, %v851
    %vm964 = vcmp.eq.f32.partialorder %v956, %v851
    %vm965 = vcmp.eq.f32.partialorder %v957, %v851
    %vm966 = vcmp.eq.f32.partialorder %v958, %v851
    %vm967 = vcmp.eq.f32.partialorder %v959, %v851
    %vm968 = vcmp.eq.f32.partialorder %v960, %v851
    %v969 = vsel %vm961, %v79, 0.0
    %v970 = vsel %vm962, %v80, 0.0
    %v971 = vsel %vm963, %v81, 0.0
    %v972 = vsel %vm964, %v82, 0.0
    %v973 = vsel %vm965, %v83, 0.0
    %v974 = vsel %vm966, %v84, 0.0
    %v975 = vsel %vm967, %v85, 0.0
    %v976 = vsel %vm968, %v86, 0.0
    %v977 = vadd.f32 %v969, %v970
    %v978 = vadd.f32 %v977, %v971
    %v979 = vadd.f32 %v978, %v972
    %v980 = vadd.f32 %v979, %v973
    %v981 = vadd.f32 %v980, %v974
    %v982 = vadd.f32 %v981, %v975
    %v983 = vadd.f32 %v982, %v976
    %v984 = vsub.f32 %v952, %v983
    %v985 = vsel %vm852, %v984, 0.0
    %986 = vadd.xlane.f32.xlu0 %v985
    %v987 = vpop.xlane.xlu0 %986
    %vm988 = vmxor %vm852, 1
    %v989 = vsel %vm988, %v984, 0.0
    %v990 = vmul.f32 %v856, 3.0
    %v991 = vmin.f32 %v990, 128.0
    %992 = vmax.xlane.f32.xlu0 %v989
    %v993 = vpop.xlane.xlu0 %992
    %v994 = vadd.f32 %v993, -1.0
    %v995 = vmul.f32 %v994, 0.5
    %vm996 = vcmp.gt.f32.partialorder %v989, %v995
    %v997 = vsel %vm996, 1, 0
    %v998 = vcvt.s32.f32 %v997
    %999 = vadd.xlane.f32.xlu0 %v998
    %v1000 = vpop.xlane.xlu0 %999
    %vm1001 = vcmp.ge.f32.partialorder %v1000, %v991
    %v1002 = vsel %vm1001, %v995, -1.0
    %v1003 = vsel %vm1001, %v993, %v995
    %v1004 = vadd.f32 %v1002, %v1003
    %v1005 = vmul.f32 %v1004, 0.5
    %vm1006 = vcmp.gt.f32.partialorder %v989, %v1005
    %v1007 = vsel %vm1006, 1, 0
    %v1008 = vcvt.s32.f32 %v1007
    %1009 = vadd.xlane.f32.xlu0 %v1008
    %v1010 = vpop.xlane.xlu0 %1009
    %vm1011 = vcmp.ge.f32.partialorder %v1010, %v991
    %v1012 = vsel %vm1011, %v1005, %v1002
    %v1013 = vsel %vm1011, %v1003, %v1005
    %v1014 = vadd.f32 %v1012, %v1013
    %v1015 = vmul.f32 %v1014, 0.5
    %vm1016 = vcmp.gt.f32.partialorder %v989, %v1015
    %v1017 = vsel %vm1016, 1, 0
    %v1018 = vcvt.s32.f32 %v1017
    %1019 = vadd.xlane.f32.xlu0 %v1018
    %v1020 = vpop.xlane.xlu0 %1019
    %vm1021 = vcmp.ge.f32.partialorder %v1020, %v991
    %v1022 = vsel %vm1021, %v1015, %v1012
    %v1023 = vsel %vm1021, %v1013, %v1015
    %v1024 = vadd.f32 %v1022, %v1023
    %v1025 = vmul.f32 %v1024, 0.5
    %vm1026 = vcmp.gt.f32.partialorder %v989, %v1025
    %v1027 = vsel %vm1026, 1, 0
    %v1028 = vcvt.s32.f32 %v1027
    %1029 = vadd.xlane.f32.xlu0 %v1028
    %v1030 = vpop.xlane.xlu0 %1029
    %vm1031 = vcmp.ge.f32.partialorder %v1030, %v991
    %v1032 = vsel %vm1031, %v1025, %v1022
    %v1033 = vsel %vm1031, %v1023, %v1025
    %v1034 = vadd.f32 %v1032, %v1033
    %v1035 = vmul.f32 %v1034, 0.5
    %vm1036 = vcmp.gt.f32.partialorder %v989, %v1035
    %v1037 = vsel %vm1036, 1, 0
    %v1038 = vcvt.s32.f32 %v1037
    %1039 = vadd.xlane.f32.xlu0 %v1038
    %v1040 = vpop.xlane.xlu0 %1039
    %vm1041 = vcmp.ge.f32.partialorder %v1040, %v991
    %v1042 = vsel %vm1041, %v1035, %v1032
    %v1043 = vsel %vm1041, %v1033, %v1035
    %v1044 = vadd.f32 %v1042, %v1043
    %v1045 = vmul.f32 %v1044, 0.5
    %vm1046 = vcmp.gt.f32.partialorder %v989, %v1045
    %v1047 = vsel %vm1046, 1, 0
    %v1048 = vcvt.s32.f32 %v1047
    %1049 = vadd.xlane.f32.xlu0 %v1048
    %v1050 = vpop.xlane.xlu0 %1049
    %vm1051 = vcmp.ge.f32.partialorder %v1050, %v991
    %v1052 = vsel %vm1051, %v1045, %v1042
    %v1053 = vsel %vm1051, %v1043, %v1045
    %v1054 = vadd.f32 %v1052, %v1053
    %v1055 = vmul.f32 %v1054, 0.5
    %vm1056 = vcmp.gt.f32.partialorder %v989, %v1055
    %v1057 = vsel %vm1056, 1, 0
    %v1058 = vcvt.s32.f32 %v1057
    %1059 = vadd.xlane.f32.xlu0 %v1058
    %v1060 = vpop.xlane.xlu0 %1059
    %vm1061 = vcmp.ge.f32.partialorder %v1060, %v991
    %v1062 = vsel %vm1061, %v1055, %v1052
    %v1063 = vsel %vm1061, %v1053, %v1055
    %v1064 = vadd.f32 %v1062, %v1063
    %v1065 = vmul.f32 %v1064, 0.5
    %vm1066 = vcmp.gt.f32.partialorder %v989, %v1065
    %v1067 = vsel %vm1066, 1, 0
    %v1068 = vcvt.s32.f32 %v1067
    %1069 = vadd.xlane.f32.xlu0 %v1068
    %v1070 = vpop.xlane.xlu0 %1069
    %vm1071 = vcmp.ge.f32.partialorder %v1070, %v991
    %v1072 = vsel %vm1071, %v1065, %v1062
    %v1073 = vsel %vm1071, %v1063, %v1065
    %v1074 = vadd.f32 %v1072, %v1073
    %v1075 = vmul.f32 %v1074, 0.5
    %vm1076 = vcmp.gt.f32.partialorder %v989, %v1075
    %v1077 = vsel %vm1076, 1, 0
    %v1078 = vcvt.s32.f32 %v1077
    %1079 = vadd.xlane.f32.xlu0 %v1078
    %v1080 = vpop.xlane.xlu0 %1079
    %vm1081 = vcmp.ge.f32.partialorder %v1080, %v991
    %v1082 = vsel %vm1081, %v1075, %v1072
    %v1083 = vsel %vm1081, %v1073, %v1075
    %v1084 = vadd.f32 %v1082, %v1083
    %v1085 = vmul.f32 %v1084, 0.5
    %vm1086 = vcmp.gt.f32.partialorder %v989, %v1085
    %v1087 = vsel %vm1086, 1, 0
    %v1088 = vcvt.s32.f32 %v1087
    %1089 = vadd.xlane.f32.xlu0 %v1088
    %v1090 = vpop.xlane.xlu0 %1089
    %vm1091 = vcmp.ge.f32.partialorder %v1090, %v991
    %v1092 = vsel %vm1091, %v1085, %v1082
    %v1093 = vsel %vm1091, %v1083, %v1085
    %v1094 = vadd.f32 %v1092, %v1093
    %v1095 = vmul.f32 %v1094, 0.5
    %vm1096 = vcmp.gt.f32.partialorder %v989, %v1095
    %v1097 = vsel %vm1096, 1, 0
    %v1098 = vcvt.s32.f32 %v1097
    %1099 = vadd.xlane.f32.xlu0 %v1098
    %v1100 = vpop.xlane.xlu0 %1099
    %vm1101 = vcmp.ge.f32.partialorder %v1100, %v991
    %v1102 = vsel %vm1101, %v1095, %v1092
    %v1103 = vsel %vm1101, %v1093, %v1095
    %v1104 = vadd.f32 %v1102, %v1103
    %v1105 = vmul.f32 %v1104, 0.5
    %vm1106 = vcmp.gt.f32.partialorder %v989, %v1105
    %v1107 = vsel %vm1106, 1, 0
    %v1108 = vcvt.s32.f32 %v1107
    %1109 = vadd.xlane.f32.xlu0 %v1108
    %v1110 = vpop.xlane.xlu0 %1109
    %vm1111 = vcmp.ge.f32.partialorder %v1110, %v991
    %v1112 = vsel %vm1111, %v1105, %v1102
    %v1113 = vsel %vm1111, %v1103, %v1105
    %v1114 = vadd.f32 %v1112, %v1113
    %v1115 = vmul.f32 %v1114, 0.5
    %vm1116 = vcmp.gt.f32.partialorder %v989, %v1115
    %v1117 = vsel %vm1116, 1, 0
    %v1118 = vcvt.s32.f32 %v1117
    %1119 = vadd.xlane.f32.xlu0 %v1118
    %v1120 = vpop.xlane.xlu0 %1119
    %vm1121 = vcmp.ge.f32.partialorder %v1120, %v991
    %v1122 = vsel %vm1121, %v1115, %v1112
    %v1123 = vsel %vm1121, %v1113, %v1115
    %v1124 = vadd.f32 %v1122, %v1123
    %v1125 = vmul.f32 %v1124, 0.5
    %vm1126 = vcmp.gt.f32.partialorder %v989, %v1125
    %v1127 = vsel %vm1126, 1, 0
    %v1128 = vcvt.s32.f32 %v1127
    %1129 = vadd.xlane.f32.xlu0 %v1128
    %v1130 = vpop.xlane.xlu0 %1129
    %vm1131 = vcmp.ge.f32.partialorder %v1130, %v991
    %v1132 = vsel %vm1131, %v1125, %v1122
    %v1133 = vsel %vm1131, %v1123, %v1125
    %v1134 = vadd.f32 %v1132, %v1133
    %v1135 = vmul.f32 %v1134, 0.5
    %vm1136 = vcmp.gt.f32.partialorder %v989, %v1135
    %v1137 = vsel %vm1136, 1, 0
    %v1138 = vcvt.s32.f32 %v1137
    %1139 = vadd.xlane.f32.xlu0 %v1138
    %v1140 = vpop.xlane.xlu0 %1139
    %vm1141 = vcmp.ge.f32.partialorder %v1140, %v991
    %v1142 = vsel %vm1141, %v1135, %v1132
    %v1143 = vsel %vm1141, %v1133, %v1135
    %v1144 = vadd.f32 %v1142, %v1143
    %v1145 = vmul.f32 %v1144, 0.5
    %vm1146 = vcmp.gt.f32.partialorder %v989, %v1145
    %v1147 = vsel %vm1146, 1, 0
    %v1148 = vcvt.s32.f32 %v1147
    %1149 = vadd.xlane.f32.xlu0 %v1148
    %v1150 = vpop.xlane.xlu0 %1149
    %vm1151 = vcmp.ge.f32.partialorder %v1150, %v991
    %v1152 = vsel %vm1151, %v1145, %v1142
    %v1153 = vsel %vm1151, %v1143, %v1145
    %v1154 = vadd.f32 %v1152, %v1153
    %v1155 = vmul.f32 %v1154, 0.5
    %vm1156 = vcmp.gt.f32.partialorder %v989, %v1155
    %v1157 = vsel %vm1156, 1, 0
    %v1158 = vcvt.s32.f32 %v1157
    %1159 = vadd.xlane.f32.xlu0 %v1158
    %v1160 = vpop.xlane.xlu0 %1159
    %vm1161 = vcmp.ge.f32.partialorder %v1160, %v991
    %v1162 = vsel %vm1161, %v1155, %v1152
    %v1163 = vsel %vm1161, %v1153, %v1155
    %v1164 = vadd.f32 %v1162, %v1163
    %v1165 = vmul.f32 %v1164, 0.5
    %vm1166 = vcmp.gt.f32.partialorder %v989, %v1165
    %v1167 = vsel %vm1166, 1, 0
    %v1168 = vcvt.s32.f32 %v1167
    %1169 = vadd.xlane.f32.xlu0 %v1168
    %v1170 = vpop.xlane.xlu0 %1169
    %vm1171 = vcmp.ge.f32.partialorder %v1170, %v991
    %v1172 = vsel %vm1171, %v1165, %v1162
    %v1173 = vsel %vm1171, %v1163, %v1165
    %v1174 = vadd.f32 %v1172, %v1173
    %v1175 = vmul.f32 %v1174, 0.5
    %vm1176 = vcmp.gt.f32.partialorder %v989, %v1175
    %v1177 = vsel %vm1176, 1, 0
    %v1178 = vcvt.s32.f32 %v1177
    %1179 = vadd.xlane.f32.xlu0 %v1178
    %v1180 = vpop.xlane.xlu0 %1179
    %vm1181 = vcmp.ge.f32.partialorder %v1180, %v991
    %v1182 = vsel %vm1181, %v1175, %v1172
    %v1183 = vsel %vm1181, %v1173, %v1175
    %v1184 = vadd.f32 %v1182, %v1183
    %v1185 = vmul.f32 %v1184, 0.5
    %vm1186 = vcmp.gt.f32.partialorder %v989, %v1185
    %v1187 = vsel %vm1186, 1, 0
    %v1188 = vcvt.s32.f32 %v1187
    %1189 = vadd.xlane.f32.xlu0 %v1188
    %v1190 = vpop.xlane.xlu0 %1189
    %vm1191 = vcmp.ge.f32.partialorder %v1190, %v991
    %v1192 = vsel %vm1191, %v1185, %v1182
    %v1193 = vsel %vm1191, %v1183, %v1185
    %v1194 = vadd.f32 %v1192, %v1193
    %v1195 = vmul.f32 %v1194, 0.5
    %vm1196 = vcmp.gt.f32.partialorder %v989, %v1195
    %v1197 = vsel %vm1196, 1, 0
    %v1198 = vcvt.s32.f32 %v1197
    %1199 = vadd.xlane.f32.xlu0 %v1198
    %v1200 = vpop.xlane.xlu0 %1199
    %vm1201 = vcmp.ge.f32.partialorder %v1200, %v991
    %v1202 = vsel %vm1201, %v1195, %v1192
    %v1203 = vsel %vm1201, %v1193, %v1195
    %v1204 = vadd.f32 %v1202, %v1203
    %v1205 = vmul.f32 %v1204, 0.5
    %vm1206 = vcmp.gt.f32.partialorder %v989, %v1205
    %v1207 = vsel %vm1206, 1, 0
    %v1208 = vcvt.s32.f32 %v1207
    %1209 = vadd.xlane.f32.xlu0 %v1208
    %v1210 = vpop.xlane.xlu0 %1209
    %vm1211 = vcmp.ge.f32.partialorder %v1210, %v991
    %v1212 = vsel %vm1211, %v1205, %v1202
    %v1213 = vsel %vm1211, %v1203, %v1205
    %v1214 = vadd.f32 %v1212, %v1213
    %v1215 = vmul.f32 %v1214, 0.5
    %vm1216 = vcmp.gt.f32.partialorder %v989, %v1215
    %v1217 = vsel %vm1216, 1, 0
    %v1218 = vcvt.s32.f32 %v1217
    %1219 = vadd.xlane.f32.xlu0 %v1218
    %v1220 = vpop.xlane.xlu0 %1219
    %vm1221 = vcmp.ge.f32.partialorder %v1220, %v991
    %v1222 = vsel %vm1221, %v1215, %v1212
    %v1223 = vsel %vm1221, %v1213, %v1215
    %v1224 = vadd.f32 %v1222, %v1223
    %v1225 = vmul.f32 %v1224, 0.5
    %vm1226 = vcmp.gt.f32.partialorder %v989, %v1225
    %v1227 = vsel %vm1226, 1, 0
    %v1228 = vcvt.s32.f32 %v1227
    %1229 = vadd.xlane.f32.xlu0 %v1228
    %v1230 = vpop.xlane.xlu0 %1229
    %vm1231 = vcmp.ge.f32.partialorder %v1230, %v991
    %v1232 = vsel %vm1231, %v1225, %v1222
    %v1233 = vsel %vm1231, %v1223, %v1225
    %v1234 = vadd.f32 %v1232, %v1233
    %v1235 = vmul.f32 %v1234, 0.5
    %vm1236 = vcmp.gt.f32.partialorder %v989, %v1235
    %v1237 = vsel %vm1236, 1, 0
    %v1238 = vcvt.s32.f32 %v1237
    %1239 = vadd.xlane.f32.xlu0 %v1238
    %v1240 = vpop.xlane.xlu0 %1239
    %vm1241 = vcmp.ge.f32.partialorder %v1240, %v991
    %v1242 = vsel %vm1241, %v1235, %v1232
    %v1243 = vsel %vm1241, %v1233, %v1235
    %v1244 = vadd.f32 %v1242, %v1243
    %v1245 = vmul.f32 %v1244, 0.5
    %vm1246 = vcmp.gt.f32.partialorder %v989, %v1245
    %v1247 = vsel %vm1246, 1, 0
    %v1248 = vcvt.s32.f32 %v1247
    %1249 = vadd.xlane.f32.xlu0 %v1248
    %v1250 = vpop.xlane.xlu0 %1249
    %vm1251 = vcmp.ge.f32.partialorder %v1250, %v991
    %v1252 = vsel %vm1251, %v1245, %v1242
    %v1253 = vsel %vm1251, %v1243, %v1245
    %v1254 = vadd.f32 %v1252, %v1253
    %v1255 = vmul.f32 %v1254, 0.5
    %vm1256 = vcmp.gt.f32.partialorder %v989, %v1255
    %v1257 = vsel %vm1256, 1, 0
    %v1258 = vcvt.s32.f32 %v1257
    %1259 = vadd.xlane.f32.xlu0 %v1258
    %v1260 = vpop.xlane.xlu0 %1259
    %vm1261 = vcmp.ge.f32.partialorder %v1260, %v991
    %v1262 = vsel %vm1261, %v1255, %v1252
    %v1263 = vsel %vm1261, %v1253, %v1255
    %v1264 = vadd.f32 %v1262, %v1263
    %v1265 = vmul.f32 %v1264, 0.5
    %vm1266 = vcmp.gt.f32.partialorder %v989, %v1265
    %v1267 = vsel %vm1266, 1, 0
    %v1268 = vcvt.s32.f32 %v1267
    %1269 = vadd.xlane.f32.xlu0 %v1268
    %v1270 = vpop.xlane.xlu0 %1269
    %vm1271 = vcmp.ge.f32.partialorder %v1270, %v991
    %v1272 = vsel %vm1271, %v1265, %v1262
    %v1273 = vsel %vm1271, %v1263, %v1265
    %v1274 = vadd.f32 %v1272, %v1273
    %v1275 = vmul.f32 %v1274, 0.5
    %vm1276 = vcmp.gt.f32.partialorder %v989, %v1275
    %v1277 = vsel %vm1276, 1, 0
    %v1278 = vcvt.s32.f32 %v1277
    %1279 = vadd.xlane.f32.xlu0 %v1278
    %v1280 = vpop.xlane.xlu0 %1279
    %vm1281 = vcmp.ge.f32.partialorder %v1280, %v991
    %v1282 = vsel %vm1281, %v1275, %v1272
    %v1283 = vsel %vm1281, %v1273, %v1275
    %v1284 = vadd.f32 %v1282, %v1283
    %v1285 = vmul.f32 %v1284, 0.5
    %vm1286 = vcmp.gt.f32.partialorder %v989, %v1285
    %v1287 = vsel %vm1286, 1, 0
    %v1288 = vcvt.s32.f32 %v1287
    %1289 = vadd.xlane.f32.xlu0 %v1288
    %v1290 = vpop.xlane.xlu0 %1289
    %vm1291 = vcmp.ge.f32.partialorder %v1290, %v991
    %v1292 = vsel %vm1291, %v1285, %v1282
    %v1293 = vsel %vm1291, %v1283, %v1285
    %v1294 = vadd.f32 %v1292, %v1293
    %v1295 = vmul.f32 %v1294, 0.5
    %vm1296 = vcmp.gt.f32.partialorder %v989, %v1295
    %v1297 = vsel %vm1296, 1, 0
    %v1298 = vcvt.s32.f32 %v1297
    %1299 = vadd.xlane.f32.xlu0 %v1298
    %v1300 = vpop.xlane.xlu0 %1299
    %vm1301 = vcmp.ge.f32.partialorder %v1300, %v991
    %v1302 = vsel %vm1301, %v1295, %v1292
    %v1303 = vsel %vm1301, %v1293, %v1295
    %v1304 = vadd.f32 %v1302, %v1303
    %v1305 = vmul.f32 %v1304, 0.5
    %vm1306 = vcmp.gt.f32.partialorder %v989, %v1305
    %v1307 = vsel %vm1306, 1, 0
    %v1308 = vcvt.s32.f32 %v1307
    %1309 = vadd.xlane.f32.xlu0 %v1308
    %v1310 = vpop.xlane.xlu0 %1309
    %vm1311 = vcmp.ge.f32.partialorder %v1310, %v991
    %v1312 = vsel %vm1311, %v1305, %v1302
    %v1313 = vsel %vm1311, %v1303, %v1305
    %v1314 = vadd.f32 %v1312, %v1313
    %v1315 = vmul.f32 %v1314, 0.5
    %vm1316 = vcmp.gt.f32.partialorder %v989, %v1315
    %v1317 = vsel %vm1316, 1, 0
    %v1318 = vcvt.s32.f32 %v1317
    %1319 = vadd.xlane.f32.xlu0 %v1318
    %v1320 = vpop.xlane.xlu0 %1319
    %vm1321 = vcmp.ge.f32.partialorder %v1320, %v991
    %v1322 = vsel %vm1321, %v1315, %v1312
    %v1323 = vsel %vm1321, %v1313, %v1315
    %v1324 = vadd.f32 %v1322, %v1323
    %v1325 = vmul.f32 %v1324, 0.5
    %vm1326 = vcmp.gt.f32.partialorder %v989, %v1325
    %v1327 = vsel %vm1326, 1, 0
    %v1328 = vcvt.s32.f32 %v1327
    %1329 = vadd.xlane.f32.xlu0 %v1328
    %v1330 = vpop.xlane.xlu0 %1329
    %vm1331 = vcmp.ge.f32.partialorder %v1330, %v991
    %v1332 = vsel %vm1331, %v1325, %v1322
    %v1333 = vsel %vm1331, %v1323, %v1325
    %v1334 = vadd.f32 %v1332, %v1333
    %v1335 = vmul.f32 %v1334, 0.5
    %vm1336 = vcmp.gt.f32.partialorder %v989, %v1335
    %v1337 = vsel %vm1336, 1, 0
    %v1338 = vcvt.s32.f32 %v1337
    %1339 = vadd.xlane.f32.xlu0 %v1338
    %v1340 = vpop.xlane.xlu0 %1339
    %vm1341 = vcmp.ge.f32.partialorder %v1340, %v991
    %v1342 = vsel %vm1341, %v1335, %v1332
    %v1343 = vsel %vm1341, %v1333, %v1335
    %v1344 = vadd.f32 %v1342, %v1343
    %v1345 = vmul.f32 %v1344, 0.5
    %vm1346 = vcmp.gt.f32.partialorder %v989, %v1345
    %v1347 = vsel %vm1346, 1, 0
    %v1348 = vcvt.s32.f32 %v1347
    %1349 = vadd.xlane.f32.xlu0 %v1348
    %v1350 = vpop.xlane.xlu0 %1349
    %vm1351 = vcmp.ge.f32.partialorder %v1350, %v991
    %v1352 = vsel %vm1351, %v1345, %v1342
    %v1353 = vsel %vm1351, %v1343, %v1345
    %v1354 = vadd.f32 %v1352, %v1353
    %v1355 = vmul.f32 %v1354, 0.5
    %vm1356 = vcmp.gt.f32.partialorder %v989, %v1355
    %v1357 = vsel %vm1356, 1, 0
    %v1358 = vcvt.s32.f32 %v1357
    %1359 = vadd.xlane.f32.xlu0 %v1358
    %v1360 = vpop.xlane.xlu0 %1359
    %vm1361 = vcmp.ge.f32.partialorder %v1360, %v991
    %v1362 = vsel %vm1361, %v1355, %v1352
    %v1363 = vsel %vm1361, %v1353, %v1355
    %v1364 = vadd.f32 %v1362, %v1363
    %v1365 = vmul.f32 %v1364, 0.5
    %vm1366 = vcmp.gt.f32.partialorder %v989, %v1365
    %v1367 = vsel %vm1366, 1, 0
    %v1368 = vcvt.s32.f32 %v1367
    %1369 = vadd.xlane.f32.xlu0 %v1368
    %v1370 = vpop.xlane.xlu0 %1369
    %vm1371 = vcmp.ge.f32.partialorder %v1370, %v991
    %v1372 = vsel %vm1371, %v1365, %v1362
    %v1373 = vsel %vm1371, %v1363, %v1365
    %v1374 = vadd.f32 %v1372, %v1373
    %v1375 = vmul.f32 %v1374, 0.5
    %vm1376 = vcmp.gt.f32.partialorder %v989, %v1375
    %v1377 = vsel %vm1376, 1, 0
    %v1378 = vcvt.s32.f32 %v1377
    %1379 = vadd.xlane.f32.xlu0 %v1378
    %v1380 = vpop.xlane.xlu0 %1379
    %vm1381 = vcmp.ge.f32.partialorder %v1380, %v991
    %v1382 = vsel %vm1381, %v1375, %v1372
    %v1383 = vsel %vm1381, %v1373, %v1375
    %v1384 = vadd.f32 %v1382, %v1383
    %v1385 = vmul.f32 %v1384, 0.5
    %vm1386 = vcmp.gt.f32.partialorder %v989, %v1385
    %v1387 = vsel %vm1386, 1, 0
    %v1388 = vcvt.s32.f32 %v1387
    %1389 = vadd.xlane.f32.xlu0 %v1388
    %v1390 = vpop.xlane.xlu0 %1389
    %vm1391 = vcmp.ge.f32.partialorder %v1390, %v991
    %v1392 = vsel %vm1391, %v1383, %v1385
    %vm1393 = vcmp.le.f32.partialorder %v989, %v1392
    %v1394 = vsel %vm1393, %v989, -1.0
    %1395 = vmax.xlane.f32.xlu0 %v1394
    %v1396 = vpop.xlane.xlu0 %1395
    %vm1397 = vcmp.gt.f32.partialorder %v989, %v1396
    %v1398 = vsel %vm1397, 1, 0
    %v1399 = vcvt.s32.f32 %v1398
    %1400 = vadd.xlane.f32.xlu0 %v1399
    %v1401 = vpop.xlane.xlu0 %1400
    %v1402 = vsel %vm1397, %v989, 0.0
    %1403 = vadd.xlane.f32.xlu0 %v1402
    %v1404 = vpop.xlane.xlu0 %1403
    %v1405 = vsub.f32 %v991, %v1401
    %v1406 = vmax.f32 %v1405, 0.0
    %v1407 = vmul.f32 %v1406, %v1396
    %v1408 = vadd.f32 %v1404, %v1407
    %vm1409 = vcmp.ge.f32.partialorder %v991, 0.5
    %v1410 = vsel %vm1409, %v1408, 0.0
    %vm1411 = vcmp.eq.s32.totalorder %v477, 0
    %v1412 = vsel %vm1411, %v911, 0.0
    %vm1413 = vcmp.eq.s32.totalorder %v477, 1
    %v1414 = vsel %vm1413, %v856, %v1412
    %vm1415 = vcmp.eq.s32.totalorder %v477, 2
    %v1416 = vsel %vm1415, %v987, %v1414
    %vm1417 = vcmp.eq.s32.totalorder %v477, 3
    %v1418 = vsel %vm1417, %v1410, %v1416
    %1419 = vst [vmem:[#allocation8] sm:$0xff] %v1418
    // Predicated region
    $region38: #{tpu_custom_call.1} parent=1 // pred_check
      _
    $region39: #{tpu_custom_call.1} parent=1 // pred_check_branch
      %1421 = sbr.rel (0) target = $region41
    $region40: #{tpu_custom_call.1} parent=1 // pred_region
      %s1423 = ssub.s32 128, 128
      %1424 = vsyncadd [#allocation4], %s1423
      %s1426 = sshll.u32 [#allocation8], 4
      %s1427 = int_to_ptr.vmem [resolvable:$true] %s1426
      %1429 = dma.vmem_to_hbm [thread:$0]  %s1427, 128, %s6, [#allocation4]
    $region41: #{tpu_custom_call.1} parent=1 // pred_fallthru
      _
    // Predicated region
    $region42: #{tpu_custom_call.1} parent=1 // pred_check
      _
    $region43: #{tpu_custom_call.1} parent=1 // pred_check_branch
      %1431 = sbr.rel (0) target = $region45
    $region44: #{tpu_custom_call.1} parent=1 // pred_region
      %1432 = dma.done [#allocation4], 128
    $region45: #{tpu_custom_call.1} parent=1 // pred_fallthru
      _
    %1433 = vsyncpa [#allocation3], 1
    %1434 = vsyncpa [#allocation6], 1
    %1435 = vsyncpa [#allocation4], 1

</llo_original>
